<compile_context>
chip_gen: v7x
topology: tpu7x:2x2x1
jax: 0.10.0
libtpu: 0.0.40
codegen_flags: <defaults>
</compile_context>

<pallas_src>
import jax
import jax.numpy as jnp
from jax import lax
from jax.experimental import pallas as pl
from jax.experimental.pallas import tpu as pltpu


def make_beta_lstm_kernel(layers, dim, M, T, input_dim):
    n_upper = 3 * (layers - 1)

    def kernel(*refs):
        h0_ref, c0_ref, x_ref = refs[0], refs[1], refs[2]
        wih0_ref, whh0_ref, b0_ref = refs[3], refs[4], refs[5]
        upper_refs = refs[6:6 + n_upper]
        v_ref = refs[6 + n_upper]
        out_ref = refs[7 + n_upper]
        xg_scr, ht_scr = refs[8 + n_upper], refs[9 + n_upper]

        # --- hoisted layer-0 input projection (all T timesteps, one matmul) ---
        # Combined layer-0 bias (b_ih + b_hh, g-columns pre-scaled) folded in.
        xg_scr[...] = (
            jnp.dot(x_ref[...].astype(jnp.bfloat16), wih0_ref[...],
                    preferred_element_type=jnp.float32)
            + b0_ref[...])

        # --- hoist loop-invariant weight loads / bias broadcasts --------------
        whh0 = whh0_ref[...]                              # (dim, 4*dim) bf16
        wih_u, whh_u, b_u = [], [], []
        for l in range(1, layers):
            base = 3 * (l - 1)
            wih_u.append(upper_refs[base][...])           # (dim, 4*dim) bf16
            whh_u.append(upper_refs[base + 1][...])       # (dim, 4*dim) bf16
            b_u.append(jnp.broadcast_to(upper_refs[base + 2][...], (M, 4 * dim)))
        v_w = v_ref[...]                                  # (dim, 1) f32

        def lstm_cell(gates, c):
            # Gate order [i, f, g, o] (PyTorch). The g-gate pre-activation was
            # pre-scaled by 2 host-side, so a single full-width sigmoid pass
            # covers all gates: tanh(x) = 2*sigmoid(2x) - 1.
            sg = jax.nn.sigmoid(gates)
            i_g = sg[:, 0 * dim:1 * dim]
            f_g = sg[:, 1 * dim:2 * dim]
            g_g = 2.0 * sg[:, 2 * dim:3 * dim] - 1.0
            o_g = sg[:, 3 * dim:4 * dim]
            c_new = f_g * c + i_g * g_g
            h_new = o_g * jnp.tanh(c_new)
            return h_new, c_new

        def step(t, carry):
            hs, cs = carry
            off = t * M
            if M % 8 == 0:
                off = pl.multiple_of(off, 8)  # sublane-aligned dynamic slice

            # Upper-layer recurrent terms depend only on t-1 state: issue their
            # matmuls first so the MXU latency overlaps the layer-0 cell's
            # EUP/VALU work (off the serial chain).
            rec = [jnp.dot(hs[l].astype(jnp.bfloat16), whh_u[l - 1],
                           preferred_element_type=jnp.float32) + b_u[l - 1]
                   for l in range(1, layers)]

            # Layer 0: only the recurrent term sits on the serial critical path.
            gates0 = xg_scr[pl.ds(off, M), :] + jnp.dot(
                hs[0].astype(jnp.bfloat16), whh0,
                preferred_element_type=jnp.float32)
            h_new, c_new = lstm_cell(gates0, cs[0])
            new_hs, new_cs = [h_new], [c_new]
            inp = h_new

            # Layers >= 1: only the h_{l-1,new} @ W_ih_l matmul is serial.
            for l in range(1, layers):
                gates = rec[l - 1] + jnp.dot(
                    inp.astype(jnp.bfloat16), wih_u[l - 1],
                    preferred_element_type=jnp.float32)
                h_new, c_new = lstm_cell(gates, cs[l])
                new_hs.append(h_new)
                new_cs.append(c_new)
                inp = h_new

            # Stash top-layer hidden state; projection happens once at the end.
            ht_scr[pl.ds(off, M), :] = inp
            return (tuple(new_hs), tuple(new_cs))

        h_init = tuple(h0_ref[l] for l in range(layers))
        c_init = tuple(c0_ref[l] for l in range(layers))

        # TODO(synk): nn.LSTM inter-layer dropout (dropout > 0) is not
        # implemented; the module default (dropout=0.0) is a no-op.
        lax.fori_loop(0, T, step, (h_init, c_init),
                      unroll=(T if T <= 16 else 8))

        # --- final projection + sigmoid + single writeback --------------------
        out_ref[...] = jax.nn.sigmoid(
            jnp.dot(ht_scr[...], v_w, preferred_element_type=jnp.float32))

    return kernel


def beta_lstm_forward(x, h0, c0, layer_weights, v_w):
    """x: (T, M, input_dim); returns beta: (T, M, 1).

    layer_weights[l] = (W_ih^T (in_l, 4*dim), W_hh^T (dim, 4*dim),
                        b_ih + b_hh (1, 4*dim)), PyTorch gate order [i, f, g, o].
    """
    T, M, input_dim = x.shape
    layers, _, dim = h0.shape

    # Fold the factor 2 of tanh(x) = 2*sigmoid(2x) - 1 into the g-gate columns
    # (exact in bf16: power-of-two scale), then cast MXU operands to bf16.
    g_scale = jnp.ones((1, 4 * dim), jnp.float32).at[:, 2 * dim:3 * dim].set(2.0)

    def prep(wih_t, whh_t, b):
        return ((wih_t * g_scale).astype(jnp.bfloat16),
                (whh_t * g_scale).astype(jnp.bfloat16),
                (b * g_scale).astype(jnp.float32))

    x_flat = x.reshape(T * M, input_dim)

    flat_inputs = [h0, c0, x_flat]
    in_specs = [
        pl.BlockSpec((layers, M, dim), lambda i: (0, 0, 0)),      # h0
        pl.BlockSpec((layers, M, dim), lambda i: (0, 0, 0)),      # c0
        pl.BlockSpec((T * M, input_dim), lambda i: (0, 0)),       # x (all T)
    ]

    # Layer 0.
    wih0, whh0, b0 = prep(*layer_weights[0])
    flat_inputs += [wih0, whh0, b0]
    in_specs += [
        pl.BlockSpec((input_dim, 4 * dim), lambda i: (0, 0)),
        pl.BlockSpec((dim, 4 * dim), lambda i: (0, 0)),
        pl.BlockSpec((1, 4 * dim), lambda i: (0, 0)),
    ]

    # Layers >= 1 (kept separate so W_hh can be issued off the serial chain).
    for l in range(1, layers):
        wih, whh, b = prep(*layer_weights[l])
        flat_inputs += [wih, whh, b]
        in_specs += [
            pl.BlockSpec((dim, 4 * dim), lambda i: (0, 0)),
            pl.BlockSpec((dim, 4 * dim), lambda i: (0, 0)),
            pl.BlockSpec((1, 4 * dim), lambda i: (0, 0)),
        ]

    flat_inputs.append(v_w)
    in_specs.append(pl.BlockSpec((dim, 1), lambda i: (0, 0)))     # v

    kernel = make_beta_lstm_kernel(layers, dim, M, T, input_dim)

    grid_spec = pltpu.PrefetchScalarGridSpec(
        num_scalar_prefetch=0,
        grid=(1,),                       # single invocation; time loop inside
        in_specs=in_specs,
        out_specs=pl.BlockSpec((T * M, 1), lambda i: (0, 0)),
        scratch_shapes=[
            pltpu.VMEM((T * M, 4 * dim), jnp.float32),   # hoisted layer-0 gates
            pltpu.VMEM((T * M, dim), jnp.float32),       # top-layer hidden, all T
        ],
    )

    # VMEM guard: the xg scratch grows linearly with T. Bump the scoped-VMEM
    # limit explicitly once it exceeds the 16 MiB default headroom (chunking
    # the hoisted projection over T would be the next step for very long T).
    scratch_bytes = 4 * (T * M * 4 * dim + T * M * dim)
    io_bytes = 4 * 2 * (T * M * input_dim + T * M)
    vmem_limit = None
    if scratch_bytes + io_bytes > (12 << 20):
        vmem_limit = min(scratch_bytes + io_bytes + (8 << 20), 60 << 20)

    beta_flat = pl.pallas_call(
        kernel,
        out_shape=jax.ShapeDtypeStruct((T * M, 1), jnp.float32),
        grid_spec=grid_spec,
        compiler_params=pltpu.CompilerParams(
            dimension_semantics=("arbitrary",),
            vmem_limit_bytes=vmem_limit),
    )(*flat_inputs)

    return beta_flat.reshape(T, M, 1)


def beta_lstm_reference(x, h0, c0, layer_weights, v_w):
    """Pure-JAX reference (same math as torch.nn.LSTM + Linear + sigmoid)."""
    layers, _, dim = h0.shape

    def step(carry, x_t):
        h, c = carry
        inp = x_t
        new_h, new_c = [], []
        for l in range(layers):
            wih_t, whh_t, b = layer_weights[l]
            gates = inp @ wih_t + h[l] @ whh_t + b
            i_g = jax.nn.sigmoid(gates[:, 0 * dim:1 * dim])
            f_g = jax.nn.sigmoid(gates[:, 1 * dim:2 * dim])
            g_g = jnp.tanh(gates[:, 2 * dim:3 * dim])
            o_g = jax.nn.sigmoid(gates[:, 3 * dim:4 * dim])
            c_new = f_g * c[l] + i_g * g_g
            h_new = o_g * jnp.tanh(c_new)
            new_h.append(h_new)
            new_c.append(c_new)
            inp = h_new
        return (jnp.stack(new_h), jnp.stack(new_c)), inp

    (_, _), ht = lax.scan(step, (h0, c0), x)  # ht: (T, M, dim) top layer
    return jax.nn.sigmoid(ht @ v_w)           # (T, M, 1)


if __name__ == "__main__":
    # Small shapes consistent with the module: M regions, multi-layer LSTM.
    T, M, layers, dim, input_dim = 8, 8, 2, 32, 4

    key = jax.random.PRNGKey(0)
    keys = jax.random.split(key, 3 + 4 * layers)

    x = jax.random.normal(keys[0], (T, M, input_dim), dtype=jnp.float32)

    # Parameters (deterministic init mirroring the module's __init__ shapes).
    h0 = jnp.zeros((layers, M, dim), dtype=jnp.float32)                   # zeros
    c0 = jax.random.normal(keys[1], (layers, M, dim), dtype=jnp.float32)  # randn

    # v: Linear(dim, 1, bias=False), xavier_normal_-style init; stored (dim, 1).
    v_std = (2.0 / (dim + 1)) ** 0.5
    v_w = v_std * jax.random.normal(keys[2], (dim, 1), dtype=jnp.float32)

    # LSTM weights per layer (PyTorch reset_parameters: U(-1/sqrt(dim), ...)),
    # stored pre-transposed as (in_features, 4*dim); bias = b_ih + b_hh.
    bound = 1.0 / (dim ** 0.5)
    layer_weights = []
    for l in range(layers):
        in_l = input_dim if l == 0 else dim
        k_wih, k_whh, k_bih, k_bhh = keys[3 + 4 * l: 3 + 4 * (l + 1)]
        wih_t = jax.random.uniform(k_wih, (in_l, 4 * dim), jnp.float32, -bound, bound)
        whh_t = jax.random.uniform(k_whh, (dim, 4 * dim), jnp.float32, -bound, bound)
        b_ih = jax.random.uniform(k_bih, (4 * dim,), jnp.float32, -bound, bound)
        b_hh = jax.random.uniform(k_bhh, (4 * dim,), jnp.float32, -bound, bound)
        layer_weights.append((wih_t, whh_t, (b_ih + b_hh).reshape(1, 4 * dim)))

    beta = beta_lstm_forward(x, h0, c0, layer_weights, v_w)
    beta = jax.block_until_ready(beta)

    beta_ref = jax.block_until_ready(
        beta_lstm_reference(x, h0, c0, layer_weights, v_w))

    assert beta.shape == (T, M, 1), beta.shape
    assert jnp.allclose(beta, beta_ref, rtol=2e-2, atol=2e-2), (
        float(jnp.max(jnp.abs(beta - beta_ref))))

    print("KERNEL_OK")
</pallas_src>

<mosaic_0001>
module attributes {stable_mosaic.version = 11 : i64} {
  func.func @kernel(%arg0: i32, %arg1: memref<2x8x32xf32, #tpu.memory_space<vmem>>, %arg2: memref<2x8x32xf32, #tpu.memory_space<vmem>>, %arg3: memref<64x4xf32, #tpu.memory_space<vmem>>, %arg4: memref<4x128xbf16, #tpu.memory_space<vmem>>, %arg5: memref<32x128xbf16, #tpu.memory_space<vmem>>, %arg6: memref<1x128xf32, #tpu.memory_space<vmem>>, %arg7: memref<32x128xbf16, #tpu.memory_space<vmem>>, %arg8: memref<32x128xbf16, #tpu.memory_space<vmem>>, %arg9: memref<1x128xf32, #tpu.memory_space<vmem>>, %arg10: memref<32x1xf32, #tpu.memory_space<vmem>>, %arg11: memref<64x1xf32, #tpu.memory_space<vmem>>, %arg12: memref<64x128xf32, #tpu.memory_space<vmem>>, %arg13: memref<64x32xf32, #tpu.memory_space<vmem>>) attributes {dimension_semantics = [#tpu.dimension_semantics<arbitrary>], iteration_bounds = array<i64: 1>, scalar_prefetch = 0 : i64, scratch_operands = 2 : i64, tpu.core_type = #tpu.core_type<tc>, window_params = [{pipeline_mode = #tpu.pipeline_mode<synchronous>, transform_indices = @transform_0, window_bounds = array<i64: 2, 8, 32>}, {pipeline_mode = #tpu.pipeline_mode<synchronous>, transform_indices = @transform_1, window_bounds = array<i64: 2, 8, 32>}, {pipeline_mode = #tpu.pipeline_mode<synchronous>, transform_indices = @transform_2, window_bounds = array<i64: 64, 4>}, {pipeline_mode = #tpu.pipeline_mode<synchronous>, transform_indices = @transform_3, window_bounds = array<i64: 4, 128>}, {pipeline_mode = #tpu.pipeline_mode<synchronous>, transform_indices = @transform_4, window_bounds = array<i64: 32, 128>}, {pipeline_mode = #tpu.pipeline_mode<synchronous>, transform_indices = @transform_5, window_bounds = array<i64: 1, 128>}, {pipeline_mode = #tpu.pipeline_mode<synchronous>, transform_indices = @transform_6, window_bounds = array<i64: 32, 128>}, {pipeline_mode = #tpu.pipeline_mode<synchronous>, transform_indices = @transform_7, window_bounds = array<i64: 32, 128>}, {pipeline_mode = #tpu.pipeline_mode<synchronous>, transform_indices = @transform_8, window_bounds = array<i64: 1, 128>}, {pipeline_mode = #tpu.pipeline_mode<synchronous>, transform_indices = @transform_9, window_bounds = array<i64: 32, 1>}, {pipeline_mode = #tpu.pipeline_mode<synchronous>, transform_indices = @transform_10, window_bounds = array<i64: 64, 1>}]} {
    %c0 = arith.constant 0 : index
    %c0_0 = arith.constant 0 : index
    %0 = vector.load %arg3[%c0, %c0_0] : memref<64x4xf32, #tpu.memory_space<vmem>>, vector<64x4xf32>
    %1 = arith.truncf %0 : vector<64x4xf32> to vector<64x4xbf16>
    %c0_1 = arith.constant 0 : index
    %c0_2 = arith.constant 0 : index
    %2 = vector.load %arg4[%c0_1, %c0_2] : memref<4x128xbf16, #tpu.memory_space<vmem>>, vector<4x128xbf16>
    %cst = arith.constant dense<0.000000e+00> : vector<64x128xf32>
    %3 = tpu.matmul %1, %2, %cst {dimension_numbers = #tpu.dot_dimension_numbers<[1], [0], [0], [1], [0, 0, 1, 1], [], []>} : vector<64x4xbf16>, vector<4x128xbf16>, vector<64x128xf32> -> vector<64x128xf32>
    %c0_3 = arith.constant 0 : index
    %c0_4 = arith.constant 0 : index
    %4 = vector.load %arg6[%c0_3, %c0_4] : memref<1x128xf32, #tpu.memory_space<vmem>>, vector<1x128xf32>
    %5 = vector.broadcast %4 : vector<1x128xf32> to vector<64x128xf32>
    %6 = arith.addf %3, %5 : vector<64x128xf32>
    %c0_5 = arith.constant 0 : index
    %c0_6 = arith.constant 0 : index
    %7 = vector.load %arg12[%c0_5, %c0_6] : memref<64x128xf32, #tpu.memory_space<vmem>>, vector<64x128xf32>
    tpu.vector_store %arg12[%c0_5, %c0_6], %6 {strides = array<i32>} : memref<64x128xf32, #tpu.memory_space<vmem>>, vector<64x128xf32>,
    %c0_7 = arith.constant 0 : index
    %c0_8 = arith.constant 0 : index
    %8 = vector.load %arg5[%c0_7, %c0_8] : memref<32x128xbf16, #tpu.memory_space<vmem>>, vector<32x128xbf16>
    %c0_9 = arith.constant 0 : index
    %c0_10 = arith.constant 0 : index
    %9 = vector.load %arg7[%c0_9, %c0_10] : memref<32x128xbf16, #tpu.memory_space<vmem>>, vector<32x128xbf16>
    %c0_11 = arith.constant 0 : index
    %c0_12 = arith.constant 0 : index
    %10 = vector.load %arg8[%c0_11, %c0_12] : memref<32x128xbf16, #tpu.memory_space<vmem>>, vector<32x128xbf16>
    %c0_13 = arith.constant 0 : index
    %c0_14 = arith.constant 0 : index
    %11 = vector.load %arg9[%c0_13, %c0_14] : memref<1x128xf32, #tpu.memory_space<vmem>>, vector<1x128xf32>
    %12 = vector.shape_cast %11 : vector<1x128xf32> to vector<1x128xf32>
    %13 = vector.broadcast %12 : vector<1x128xf32> to vector<8x128xf32>
    %c0_15 = arith.constant 0 : index
    %c0_16 = arith.constant 0 : index
    %14 = vector.load %arg10[%c0_15, %c0_16] : memref<32x1xf32, #tpu.memory_space<vmem>>, vector<32x1xf32>
    %c0_17 = arith.constant 0 : index
    %c0_18 = arith.constant 0 : index
    %c0_19 = arith.constant 0 : index
    %15 = vector.load %arg1[%c0_17, %c0_18, %c0_19] : memref<2x8x32xf32, #tpu.memory_space<vmem>>, vector<1x8x32xf32>
    %16 = vector.shape_cast %15 : vector<1x8x32xf32> to vector<8x32xf32>
    %c1 = arith.constant 1 : index
    %c0_20 = arith.constant 0 : index
    %c0_21 = arith.constant 0 : index
    %17 = vector.load %arg1[%c1, %c0_20, %c0_21] : memref<2x8x32xf32, #tpu.memory_space<vmem>>, vector<1x8x32xf32>
    %18 = vector.shape_cast %17 : vector<1x8x32xf32> to vector<8x32xf32>
    %c0_22 = arith.constant 0 : index
    %c0_23 = arith.constant 0 : index
    %c0_24 = arith.constant 0 : index
    %19 = vector.load %arg2[%c0_22, %c0_23, %c0_24] : memref<2x8x32xf32, #tpu.memory_space<vmem>>, vector<1x8x32xf32>
    %20 = vector.shape_cast %19 : vector<1x8x32xf32> to vector<8x32xf32>
    %c1_25 = arith.constant 1 : index
    %c0_26 = arith.constant 0 : index
    %c0_27 = arith.constant 0 : index
    %21 = vector.load %arg2[%c1_25, %c0_26, %c0_27] : memref<2x8x32xf32, #tpu.memory_space<vmem>>, vector<1x8x32xf32>
    %22 = vector.shape_cast %21 : vector<1x8x32xf32> to vector<8x32xf32>
    %c0_i32 = arith.constant 0 : i32
    %c8_i32 = arith.constant 8 : i32
    %23 = arith.muli %c0_i32, %c8_i32 : i32
    %24 = tpu.assume_multiple %23, 8 : i32
    %25 = arith.truncf %18 : vector<8x32xf32> to vector<8x32xbf16>
    %cst_28 = arith.constant dense<0.000000e+00> : vector<8x128xf32>
    %26 = tpu.matmul %25, %10, %cst_28 {dimension_numbers = #tpu.dot_dimension_numbers<[1], [0], [0], [1], [0, 0, 1, 1], [], []>} : vector<8x32xbf16>, vector<32x128xbf16>, vector<8x128xf32> -> vector<8x128xf32>
    %27 = arith.addf %26, %13 : vector<8x128xf32>
    %28 = arith.index_cast %24 : i32 to index
    %c0_29 = arith.constant 0 : index
    %29 = vector.load %arg12[%28, %c0_29] : memref<64x128xf32, #tpu.memory_space<vmem>>, vector<8x128xf32>
    %30 = arith.truncf %16 : vector<8x32xf32> to vector<8x32xbf16>
    %cst_30 = arith.constant dense<0.000000e+00> : vector<8x128xf32>
    %31 = tpu.matmul %30, %8, %cst_30 {dimension_numbers = #tpu.dot_dimension_numbers<[1], [0], [0], [1], [0, 0, 1, 1], [], []>} : vector<8x32xbf16>, vector<32x128xbf16>, vector<8x128xf32> -> vector<8x128xf32>
    %32 = arith.addf %29, %31 : vector<8x128xf32>
    %33 = arith.negf %32 : vector<8x128xf32>
    %34 = math.exp %33 : vector<8x128xf32>
    %cst_31 = arith.constant 1.000000e+00 : f32
    %35 = vector.broadcast %cst_31 : f32 to vector<8x128xf32>
    %36 = arith.addf %35, %34 : vector<8x128xf32>
    %37 = arith.divf %35, %36 : vector<8x128xf32>
    %38 = vector.extract_strided_slice %37 {offsets = [0, 0], sizes = [8, 32], strides = [1, 1]} : vector<8x128xf32> to vector<8x32xf32>
    %39 = vector.extract_strided_slice %37 {offsets = [0, 32], sizes = [8, 32], strides = [1, 1]} : vector<8x128xf32> to vector<8x32xf32>
    %40 = vector.extract_strided_slice %37 {offsets = [0, 64], sizes = [8, 32], strides = [1, 1]} : vector<8x128xf32> to vector<8x32xf32>
    %cst_32 = arith.constant 2.000000e+00 : f32
    %41 = vector.broadcast %cst_32 : f32 to vector<8x32xf32>
    %42 = arith.mulf %41, %40 : vector<8x32xf32>
    %cst_33 = arith.constant 1.000000e+00 : f32
    %43 = vector.broadcast %cst_33 : f32 to vector<8x32xf32>
    %44 = arith.subf %42, %43 : vector<8x32xf32>
    %45 = vector.extract_strided_slice %37 {offsets = [0, 96], sizes = [8, 32], strides = [1, 1]} : vector<8x128xf32> to vector<8x32xf32>
    %46 = arith.mulf %39, %20 : vector<8x32xf32>
    %47 = arith.mulf %38, %44 : vector<8x32xf32>
    %48 = arith.addf %46, %47 : vector<8x32xf32>
    %49 = math.tanh %48 : vector<8x32xf32>
    %50 = arith.mulf %45, %49 : vector<8x32xf32>
    %51 = arith.truncf %50 : vector<8x32xf32> to vector<8x32xbf16>
    %cst_34 = arith.constant dense<0.000000e+00> : vector<8x128xf32>
    %52 = tpu.matmul %51, %9, %cst_34 {dimension_numbers = #tpu.dot_dimension_numbers<[1], [0], [0], [1], [0, 0, 1, 1], [], []>} : vector<8x32xbf16>, vector<32x128xbf16>, vector<8x128xf32> -> vector<8x128xf32>
    %53 = arith.addf %27, %52 : vector<8x128xf32>
    %54 = arith.negf %53 : vector<8x128xf32>
    %55 = math.exp %54 : vector<8x128xf32>
    %cst_35 = arith.constant 1.000000e+00 : f32
    %56 = vector.broadcast %cst_35 : f32 to vector<8x128xf32>
    %57 = arith.addf %56, %55 : vector<8x128xf32>
    %58 = arith.divf %56, %57 : vector<8x128xf32>
    %59 = vector.extract_strided_slice %58 {offsets = [0, 0], sizes = [8, 32], strides = [1, 1]} : vector<8x128xf32> to vector<8x32xf32>
    %60 = vector.extract_strided_slice %58 {offsets = [0, 32], sizes = [8, 32], strides = [1, 1]} : vector<8x128xf32> to vector<8x32xf32>
    %61 = vector.extract_strided_slice %58 {offsets = [0, 64], sizes = [8, 32], strides = [1, 1]} : vector<8x128xf32> to vector<8x32xf32>
    %cst_36 = arith.constant 2.000000e+00 : f32
    %62 = vector.broadcast %cst_36 : f32 to vector<8x32xf32>
    %63 = arith.mulf %62, %61 : vector<8x32xf32>
    %cst_37 = arith.constant 1.000000e+00 : f32
    %64 = vector.broadcast %cst_37 : f32 to vector<8x32xf32>
    %65 = arith.subf %63, %64 : vector<8x32xf32>
    %66 = vector.extract_strided_slice %58 {offsets = [0, 96], sizes = [8, 32], strides = [1, 1]} : vector<8x128xf32> to vector<8x32xf32>
    %67 = arith.mulf %60, %22 : vector<8x32xf32>
    %68 = arith.mulf %59, %65 : vector<8x32xf32>
    %69 = arith.addf %67, %68 : vector<8x32xf32>
    %70 = math.tanh %69 : vector<8x32xf32>
    %71 = arith.mulf %66, %70 : vector<8x32xf32>
    %72 = arith.index_cast %24 : i32 to index
    %c0_38 = arith.constant 0 : index
    %73 = vector.load %arg13[%72, %c0_38] : memref<64x32xf32, #tpu.memory_space<vmem>>, vector<8x32xf32>
    tpu.vector_store %arg13[%72, %c0_38], %71 {strides = array<i32>} : memref<64x32xf32, #tpu.memory_space<vmem>>, vector<8x32xf32>,
    %c1_i32 = arith.constant 1 : i32
    %c8_i32_39 = arith.constant 8 : i32
    %74 = arith.muli %c1_i32, %c8_i32_39 : i32
    %75 = tpu.assume_multiple %74, 8 : i32
    %76 = arith.truncf %71 : vector<8x32xf32> to vector<8x32xbf16>
    %cst_40 = arith.constant dense<0.000000e+00> : vector<8x128xf32>
    %77 = tpu.matmul %76, %10, %cst_40 {dimension_numbers = #tpu.dot_dimension_numbers<[1], [0], [0], [1], [0, 0, 1, 1], [], []>} : vector<8x32xbf16>, vector<32x128xbf16>, vector<8x128xf32> -> vector<8x128xf32>
    %78 = arith.addf %77, %13 : vector<8x128xf32>
    %79 = arith.index_cast %75 : i32 to index
    %c0_41 = arith.constant 0 : index
    %80 = vector.load %arg12[%79, %c0_41] : memref<64x128xf32, #tpu.memory_space<vmem>>, vector<8x128xf32>
    %81 = arith.truncf %50 : vector<8x32xf32> to vector<8x32xbf16>
    %cst_42 = arith.constant dense<0.000000e+00> : vector<8x128xf32>
    %82 = tpu.matmul %81, %8, %cst_42 {dimension_numbers = #tpu.dot_dimension_numbers<[1], [0], [0], [1], [0, 0, 1, 1], [], []>} : vector<8x32xbf16>, vector<32x128xbf16>, vector<8x128xf32> -> vector<8x128xf32>
    %83 = arith.addf %80, %82 : vector<8x128xf32>
    %84 = arith.negf %83 : vector<8x128xf32>
    %85 = math.exp %84 : vector<8x128xf32>
    %cst_43 = arith.constant 1.000000e+00 : f32
    %86 = vector.broadcast %cst_43 : f32 to vector<8x128xf32>
    %87 = arith.addf %86, %85 : vector<8x128xf32>
    %88 = arith.divf %86, %87 : vector<8x128xf32>
    %89 = vector.extract_strided_slice %88 {offsets = [0, 0], sizes = [8, 32], strides = [1, 1]} : vector<8x128xf32> to vector<8x32xf32>
    %90 = vector.extract_strided_slice %88 {offsets = [0, 32], sizes = [8, 32], strides = [1, 1]} : vector<8x128xf32> to vector<8x32xf32>
    %91 = vector.extract_strided_slice %88 {offsets = [0, 64], sizes = [8, 32], strides = [1, 1]} : vector<8x128xf32> to vector<8x32xf32>
    %cst_44 = arith.constant 2.000000e+00 : f32
    %92 = vector.broadcast %cst_44 : f32 to vector<8x32xf32>
    %93 = arith.mulf %92, %91 : vector<8x32xf32>
    %cst_45 = arith.constant 1.000000e+00 : f32
    %94 = vector.broadcast %cst_45 : f32 to vector<8x32xf32>
    %95 = arith.subf %93, %94 : vector<8x32xf32>
    %96 = vector.extract_strided_slice %88 {offsets = [0, 96], sizes = [8, 32], strides = [1, 1]} : vector<8x128xf32> to vector<8x32xf32>
    %97 = arith.mulf %90, %48 : vector<8x32xf32>
    %98 = arith.mulf %89, %95 : vector<8x32xf32>
    %99 = arith.addf %97, %98 : vector<8x32xf32>
    %100 = math.tanh %99 : vector<8x32xf32>
    %101 = arith.mulf %96, %100 : vector<8x32xf32>
    %102 = arith.truncf %101 : vector<8x32xf32> to vector<8x32xbf16>
    %cst_46 = arith.constant dense<0.000000e+00> : vector<8x128xf32>
    %103 = tpu.matmul %102, %9, %cst_46 {dimension_numbers = #tpu.dot_dimension_numbers<[1], [0], [0], [1], [0, 0, 1, 1], [], []>} : vector<8x32xbf16>, vector<32x128xbf16>, vector<8x128xf32> -> vector<8x128xf32>
    %104 = arith.addf %78, %103 : vector<8x128xf32>
    %105 = arith.negf %104 : vector<8x128xf32>
    %106 = math.exp %105 : vector<8x128xf32>
    %cst_47 = arith.constant 1.000000e+00 : f32
    %107 = vector.broadcast %cst_47 : f32 to vector<8x128xf32>
    %108 = arith.addf %107, %106 : vector<8x128xf32>
    %109 = arith.divf %107, %108 : vector<8x128xf32>
    %110 = vector.extract_strided_slice %109 {offsets = [0, 0], sizes = [8, 32], strides = [1, 1]} : vector<8x128xf32> to vector<8x32xf32>
    %111 = vector.extract_strided_slice %109 {offsets = [0, 32], sizes = [8, 32], strides = [1, 1]} : vector<8x128xf32> to vector<8x32xf32>
    %112 = vector.extract_strided_slice %109 {offsets = [0, 64], sizes = [8, 32], strides = [1, 1]} : vector<8x128xf32> to vector<8x32xf32>
    %cst_48 = arith.constant 2.000000e+00 : f32
    %113 = vector.broadcast %cst_48 : f32 to vector<8x32xf32>
    %114 = arith.mulf %113, %112 : vector<8x32xf32>
    %cst_49 = arith.constant 1.000000e+00 : f32
    %115 = vector.broadcast %cst_49 : f32 to vector<8x32xf32>
    %116 = arith.subf %114, %115 : vector<8x32xf32>
    %117 = vector.extract_strided_slice %109 {offsets = [0, 96], sizes = [8, 32], strides = [1, 1]} : vector<8x128xf32> to vector<8x32xf32>
    %118 = arith.mulf %111, %69 : vector<8x32xf32>
    %119 = arith.mulf %110, %116 : vector<8x32xf32>
    %120 = arith.addf %118, %119 : vector<8x32xf32>
    %121 = math.tanh %120 : vector<8x32xf32>
    %122 = arith.mulf %117, %121 : vector<8x32xf32>
    %123 = arith.index_cast %75 : i32 to index
    %c0_50 = arith.constant 0 : index
    %124 = vector.load %arg13[%123, %c0_50] : memref<64x32xf32, #tpu.memory_space<vmem>>, vector<8x32xf32>
    tpu.vector_store %arg13[%123, %c0_50], %122 {strides = array<i32>} : memref<64x32xf32, #tpu.memory_space<vmem>>, vector<8x32xf32>,
    %c2_i32 = arith.constant 2 : i32
    %c8_i32_51 = arith.constant 8 : i32
    %125 = arith.muli %c2_i32, %c8_i32_51 : i32
    %126 = tpu.assume_multiple %125, 8 : i32
    %127 = arith.truncf %122 : vector<8x32xf32> to vector<8x32xbf16>
    %cst_52 = arith.constant dense<0.000000e+00> : vector<8x128xf32>
    %128 = tpu.matmul %127, %10, %cst_52 {dimension_numbers = #tpu.dot_dimension_numbers<[1], [0], [0], [1], [0, 0, 1, 1], [], []>} : vector<8x32xbf16>, vector<32x128xbf16>, vector<8x128xf32> -> vector<8x128xf32>
    %129 = arith.addf %128, %13 : vector<8x128xf32>
    %130 = arith.index_cast %126 : i32 to index
    %c0_53 = arith.constant 0 : index
    %131 = vector.load %arg12[%130, %c0_53] : memref<64x128xf32, #tpu.memory_space<vmem>>, vector<8x128xf32>
    %132 = arith.truncf %101 : vector<8x32xf32> to vector<8x32xbf16>
    %cst_54 = arith.constant dense<0.000000e+00> : vector<8x128xf32>
    %133 = tpu.matmul %132, %8, %cst_54 {dimension_numbers = #tpu.dot_dimension_numbers<[1], [0], [0], [1], [0, 0, 1, 1], [], []>} : vector<8x32xbf16>, vector<32x128xbf16>, vector<8x128xf32> -> vector<8x128xf32>
    %134 = arith.addf %131, %133 : vector<8x128xf32>
    %135 = arith.negf %134 : vector<8x128xf32>
    %136 = math.exp %135 : vector<8x128xf32>
    %cst_55 = arith.constant 1.000000e+00 : f32
    %137 = vector.broadcast %cst_55 : f32 to vector<8x128xf32>
    %138 = arith.addf %137, %136 : vector<8x128xf32>
    %139 = arith.divf %137, %138 : vector<8x128xf32>
    %140 = vector.extract_strided_slice %139 {offsets = [0, 0], sizes = [8, 32], strides = [1, 1]} : vector<8x128xf32> to vector<8x32xf32>
    %141 = vector.extract_strided_slice %139 {offsets = [0, 32], sizes = [8, 32], strides = [1, 1]} : vector<8x128xf32> to vector<8x32xf32>
    %142 = vector.extract_strided_slice %139 {offsets = [0, 64], sizes = [8, 32], strides = [1, 1]} : vector<8x128xf32> to vector<8x32xf32>
    %cst_56 = arith.constant 2.000000e+00 : f32
    %143 = vector.broadcast %cst_56 : f32 to vector<8x32xf32>
    %144 = arith.mulf %143, %142 : vector<8x32xf32>
    %cst_57 = arith.constant 1.000000e+00 : f32
    %145 = vector.broadcast %cst_57 : f32 to vector<8x32xf32>
    %146 = arith.subf %144, %145 : vector<8x32xf32>
    %147 = vector.extract_strided_slice %139 {offsets = [0, 96], sizes = [8, 32], strides = [1, 1]} : vector<8x128xf32> to vector<8x32xf32>
    %148 = arith.mulf %141, %99 : vector<8x32xf32>
    %149 = arith.mulf %140, %146 : vector<8x32xf32>
    %150 = arith.addf %148, %149 : vector<8x32xf32>
    %151 = math.tanh %150 : vector<8x32xf32>
    %152 = arith.mulf %147, %151 : vector<8x32xf32>
    %153 = arith.truncf %152 : vector<8x32xf32> to vector<8x32xbf16>
    %cst_58 = arith.constant dense<0.000000e+00> : vector<8x128xf32>
    %154 = tpu.matmul %153, %9, %cst_58 {dimension_numbers = #tpu.dot_dimension_numbers<[1], [0], [0], [1], [0, 0, 1, 1], [], []>} : vector<8x32xbf16>, vector<32x128xbf16>, vector<8x128xf32> -> vector<8x128xf32>
    %155 = arith.addf %129, %154 : vector<8x128xf32>
    %156 = arith.negf %155 : vector<8x128xf32>
    %157 = math.exp %156 : vector<8x128xf32>
    %cst_59 = arith.constant 1.000000e+00 : f32
    %158 = vector.broadcast %cst_59 : f32 to vector<8x128xf32>
    %159 = arith.addf %158, %157 : vector<8x128xf32>
    %160 = arith.divf %158, %159 : vector<8x128xf32>
    %161 = vector.extract_strided_slice %160 {offsets = [0, 0], sizes = [8, 32], strides = [1, 1]} : vector<8x128xf32> to vector<8x32xf32>
    %162 = vector.extract_strided_slice %160 {offsets = [0, 32], sizes = [8, 32], strides = [1, 1]} : vector<8x128xf32> to vector<8x32xf32>
    %163 = vector.extract_strided_slice %160 {offsets = [0, 64], sizes = [8, 32], strides = [1, 1]} : vector<8x128xf32> to vector<8x32xf32>
    %cst_60 = arith.constant 2.000000e+00 : f32
    %164 = vector.broadcast %cst_60 : f32 to vector<8x32xf32>
    %165 = arith.mulf %164, %163 : vector<8x32xf32>
    %cst_61 = arith.constant 1.000000e+00 : f32
    %166 = vector.broadcast %cst_61 : f32 to vector<8x32xf32>
    %167 = arith.subf %165, %166 : vector<8x32xf32>
    %168 = vector.extract_strided_slice %160 {offsets = [0, 96], sizes = [8, 32], strides = [1, 1]} : vector<8x128xf32> to vector<8x32xf32>
    %169 = arith.mulf %162, %120 : vector<8x32xf32>
    %170 = arith.mulf %161, %167 : vector<8x32xf32>
    %171 = arith.addf %169, %170 : vector<8x32xf32>
    %172 = math.tanh %171 : vector<8x32xf32>
    %173 = arith.mulf %168, %172 : vector<8x32xf32>
    %174 = arith.index_cast %126 : i32 to index
    %c0_62 = arith.constant 0 : index
    %175 = vector.load %arg13[%174, %c0_62] : memref<64x32xf32, #tpu.memory_space<vmem>>, vector<8x32xf32>
    tpu.vector_store %arg13[%174, %c0_62], %173 {strides = array<i32>} : memref<64x32xf32, #tpu.memory_space<vmem>>, vector<8x32xf32>,
    %c3_i32 = arith.constant 3 : i32
    %c8_i32_63 = arith.constant 8 : i32
    %176 = arith.muli %c3_i32, %c8_i32_63 : i32
    %177 = tpu.assume_multiple %176, 8 : i32
    %178 = arith.truncf %173 : vector<8x32xf32> to vector<8x32xbf16>
    %cst_64 = arith.constant dense<0.000000e+00> : vector<8x128xf32>
    %179 = tpu.matmul %178, %10, %cst_64 {dimension_numbers = #tpu.dot_dimension_numbers<[1], [0], [0], [1], [0, 0, 1, 1], [], []>} : vector<8x32xbf16>, vector<32x128xbf16>, vector<8x128xf32> -> vector<8x128xf32>
    %180 = arith.addf %179, %13 : vector<8x128xf32>
    %181 = arith.index_cast %177 : i32 to index
    %c0_65 = arith.constant 0 : index
    %182 = vector.load %arg12[%181, %c0_65] : memref<64x128xf32, #tpu.memory_space<vmem>>, vector<8x128xf32>
    %183 = arith.truncf %152 : vector<8x32xf32> to vector<8x32xbf16>
    %cst_66 = arith.constant dense<0.000000e+00> : vector<8x128xf32>
    %184 = tpu.matmul %183, %8, %cst_66 {dimension_numbers = #tpu.dot_dimension_numbers<[1], [0], [0], [1], [0, 0, 1, 1], [], []>} : vector<8x32xbf16>, vector<32x128xbf16>, vector<8x128xf32> -> vector<8x128xf32>
    %185 = arith.addf %182, %184 : vector<8x128xf32>
    %186 = arith.negf %185 : vector<8x128xf32>
    %187 = math.exp %186 : vector<8x128xf32>
    %cst_67 = arith.constant 1.000000e+00 : f32
    %188 = vector.broadcast %cst_67 : f32 to vector<8x128xf32>
    %189 = arith.addf %188, %187 : vector<8x128xf32>
    %190 = arith.divf %188, %189 : vector<8x128xf32>
    %191 = vector.extract_strided_slice %190 {offsets = [0, 0], sizes = [8, 32], strides = [1, 1]} : vector<8x128xf32> to vector<8x32xf32>
    %192 = vector.extract_strided_slice %190 {offsets = [0, 32], sizes = [8, 32], strides = [1, 1]} : vector<8x128xf32> to vector<8x32xf32>
    %193 = vector.extract_strided_slice %190 {offsets = [0, 64], sizes = [8, 32], strides = [1, 1]} : vector<8x128xf32> to vector<8x32xf32>
    %cst_68 = arith.constant 2.000000e+00 : f32
    %194 = vector.broadcast %cst_68 : f32 to vector<8x32xf32>
    %195 = arith.mulf %194, %193 : vector<8x32xf32>
    %cst_69 = arith.constant 1.000000e+00 : f32
    %196 = vector.broadcast %cst_69 : f32 to vector<8x32xf32>
    %197 = arith.subf %195, %196 : vector<8x32xf32>
    %198 = vector.extract_strided_slice %190 {offsets = [0, 96], sizes = [8, 32], strides = [1, 1]} : vector<8x128xf32> to vector<8x32xf32>
    %199 = arith.mulf %192, %150 : vector<8x32xf32>
    %200 = arith.mulf %191, %197 : vector<8x32xf32>
    %201 = arith.addf %199, %200 : vector<8x32xf32>
    %202 = math.tanh %201 : vector<8x32xf32>
    %203 = arith.mulf %198, %202 : vector<8x32xf32>
    %204 = arith.truncf %203 : vector<8x32xf32> to vector<8x32xbf16>
    %cst_70 = arith.constant dense<0.000000e+00> : vector<8x128xf32>
    %205 = tpu.matmul %204, %9, %cst_70 {dimension_numbers = #tpu.dot_dimension_numbers<[1], [0], [0], [1], [0, 0, 1, 1], [], []>} : vector<8x32xbf16>, vector<32x128xbf16>, vector<8x128xf32> -> vector<8x128xf32>
    %206 = arith.addf %180, %205 : vector<8x128xf32>
    %207 = arith.negf %206 : vector<8x128xf32>
    %208 = math.exp %207 : vector<8x128xf32>
    %cst_71 = arith.constant 1.000000e+00 : f32
    %209 = vector.broadcast %cst_71 : f32 to vector<8x128xf32>
    %210 = arith.addf %209, %208 : vector<8x128xf32>
    %211 = arith.divf %209, %210 : vector<8x128xf32>
    %212 = vector.extract_strided_slice %211 {offsets = [0, 0], sizes = [8, 32], strides = [1, 1]} : vector<8x128xf32> to vector<8x32xf32>
    %213 = vector.extract_strided_slice %211 {offsets = [0, 32], sizes = [8, 32], strides = [1, 1]} : vector<8x128xf32> to vector<8x32xf32>
    %214 = vector.extract_strided_slice %211 {offsets = [0, 64], sizes = [8, 32], strides = [1, 1]} : vector<8x128xf32> to vector<8x32xf32>
    %cst_72 = arith.constant 2.000000e+00 : f32
    %215 = vector.broadcast %cst_72 : f32 to vector<8x32xf32>
    %216 = arith.mulf %215, %214 : vector<8x32xf32>
    %cst_73 = arith.constant 1.000000e+00 : f32
    %217 = vector.broadcast %cst_73 : f32 to vector<8x32xf32>
    %218 = arith.subf %216, %217 : vector<8x32xf32>
    %219 = vector.extract_strided_slice %211 {offsets = [0, 96], sizes = [8, 32], strides = [1, 1]} : vector<8x128xf32> to vector<8x32xf32>
    %220 = arith.mulf %213, %171 : vector<8x32xf32>
    %221 = arith.mulf %212, %218 : vector<8x32xf32>
    %222 = arith.addf %220, %221 : vector<8x32xf32>
    %223 = math.tanh %222 : vector<8x32xf32>
    %224 = arith.mulf %219, %223 : vector<8x32xf32>
    %225 = arith.index_cast %177 : i32 to index
    %c0_74 = arith.constant 0 : index
    %226 = vector.load %arg13[%225, %c0_74] : memref<64x32xf32, #tpu.memory_space<vmem>>, vector<8x32xf32>
    tpu.vector_store %arg13[%225, %c0_74], %224 {strides = array<i32>} : memref<64x32xf32, #tpu.memory_space<vmem>>, vector<8x32xf32>,
    %c4_i32 = arith.constant 4 : i32
    %c8_i32_75 = arith.constant 8 : i32
    %227 = arith.muli %c4_i32, %c8_i32_75 : i32
    %228 = tpu.assume_multiple %227, 8 : i32
    %229 = arith.truncf %224 : vector<8x32xf32> to vector<8x32xbf16>
    %cst_76 = arith.constant dense<0.000000e+00> : vector<8x128xf32>
    %230 = tpu.matmul %229, %10, %cst_76 {dimension_numbers = #tpu.dot_dimension_numbers<[1], [0], [0], [1], [0, 0, 1, 1], [], []>} : vector<8x32xbf16>, vector<32x128xbf16>, vector<8x128xf32> -> vector<8x128xf32>
    %231 = arith.addf %230, %13 : vector<8x128xf32>
    %232 = arith.index_cast %228 : i32 to index
    %c0_77 = arith.constant 0 : index
    %233 = vector.load %arg12[%232, %c0_77] : memref<64x128xf32, #tpu.memory_space<vmem>>, vector<8x128xf32>
    %234 = arith.truncf %203 : vector<8x32xf32> to vector<8x32xbf16>
    %cst_78 = arith.constant dense<0.000000e+00> : vector<8x128xf32>
    %235 = tpu.matmul %234, %8, %cst_78 {dimension_numbers = #tpu.dot_dimension_numbers<[1], [0], [0], [1], [0, 0, 1, 1], [], []>} : vector<8x32xbf16>, vector<32x128xbf16>, vector<8x128xf32> -> vector<8x128xf32>
    %236 = arith.addf %233, %235 : vector<8x128xf32>
    %237 = arith.negf %236 : vector<8x128xf32>
    %238 = math.exp %237 : vector<8x128xf32>
    %cst_79 = arith.constant 1.000000e+00 : f32
    %239 = vector.broadcast %cst_79 : f32 to vector<8x128xf32>
    %240 = arith.addf %239, %238 : vector<8x128xf32>
    %241 = arith.divf %239, %240 : vector<8x128xf32>
    %242 = vector.extract_strided_slice %241 {offsets = [0, 0], sizes = [8, 32], strides = [1, 1]} : vector<8x128xf32> to vector<8x32xf32>
    %243 = vector.extract_strided_slice %241 {offsets = [0, 32], sizes = [8, 32], strides = [1, 1]} : vector<8x128xf32> to vector<8x32xf32>
    %244 = vector.extract_strided_slice %241 {offsets = [0, 64], sizes = [8, 32], strides = [1, 1]} : vector<8x128xf32> to vector<8x32xf32>
    %cst_80 = arith.constant 2.000000e+00 : f32
    %245 = vector.broadcast %cst_80 : f32 to vector<8x32xf32>
    %246 = arith.mulf %245, %244 : vector<8x32xf32>
    %cst_81 = arith.constant 1.000000e+00 : f32
    %247 = vector.broadcast %cst_81 : f32 to vector<8x32xf32>
    %248 = arith.subf %246, %247 : vector<8x32xf32>
    %249 = vector.extract_strided_slice %241 {offsets = [0, 96], sizes = [8, 32], strides = [1, 1]} : vector<8x128xf32> to vector<8x32xf32>
    %250 = arith.mulf %243, %201 : vector<8x32xf32>
    %251 = arith.mulf %242, %248 : vector<8x32xf32>
    %252 = arith.addf %250, %251 : vector<8x32xf32>
    %253 = math.tanh %252 : vector<8x32xf32>
    %254 = arith.mulf %249, %253 : vector<8x32xf32>
    %255 = arith.truncf %254 : vector<8x32xf32> to vector<8x32xbf16>
    %cst_82 = arith.constant dense<0.000000e+00> : vector<8x128xf32>
    %256 = tpu.matmul %255, %9, %cst_82 {dimension_numbers = #tpu.dot_dimension_numbers<[1], [0], [0], [1], [0, 0, 1, 1], [], []>} : vector<8x32xbf16>, vector<32x128xbf16>, vector<8x128xf32> -> vector<8x128xf32>
    %257 = arith.addf %231, %256 : vector<8x128xf32>
    %258 = arith.negf %257 : vector<8x128xf32>
    %259 = math.exp %258 : vector<8x128xf32>
    %cst_83 = arith.constant 1.000000e+00 : f32
    %260 = vector.broadcast %cst_83 : f32 to vector<8x128xf32>
    %261 = arith.addf %260, %259 : vector<8x128xf32>
    %262 = arith.divf %260, %261 : vector<8x128xf32>
    %263 = vector.extract_strided_slice %262 {offsets = [0, 0], sizes = [8, 32], strides = [1, 1]} : vector<8x128xf32> to vector<8x32xf32>
    %264 = vector.extract_strided_slice %262 {offsets = [0, 32], sizes = [8, 32], strides = [1, 1]} : vector<8x128xf32> to vector<8x32xf32>
    %265 = vector.extract_strided_slice %262 {offsets = [0, 64], sizes = [8, 32], strides = [1, 1]} : vector<8x128xf32> to vector<8x32xf32>
    %cst_84 = arith.constant 2.000000e+00 : f32
    %266 = vector.broadcast %cst_84 : f32 to vector<8x32xf32>
    %267 = arith.mulf %266, %265 : vector<8x32xf32>
    %cst_85 = arith.constant 1.000000e+00 : f32
    %268 = vector.broadcast %cst_85 : f32 to vector<8x32xf32>
    %269 = arith.subf %267, %268 : vector<8x32xf32>
    %270 = vector.extract_strided_slice %262 {offsets = [0, 96], sizes = [8, 32], strides = [1, 1]} : vector<8x128xf32> to vector<8x32xf32>
    %271 = arith.mulf %264, %222 : vector<8x32xf32>
    %272 = arith.mulf %263, %269 : vector<8x32xf32>
    %273 = arith.addf %271, %272 : vector<8x32xf32>
    %274 = math.tanh %273 : vector<8x32xf32>
    %275 = arith.mulf %270, %274 : vector<8x32xf32>
    %276 = arith.index_cast %228 : i32 to index
    %c0_86 = arith.constant 0 : index
    %277 = vector.load %arg13[%276, %c0_86] : memref<64x32xf32, #tpu.memory_space<vmem>>, vector<8x32xf32>
    tpu.vector_store %arg13[%276, %c0_86], %275 {strides = array<i32>} : memref<64x32xf32, #tpu.memory_space<vmem>>, vector<8x32xf32>,
    %c5_i32 = arith.constant 5 : i32
    %c8_i32_87 = arith.constant 8 : i32
    %278 = arith.muli %c5_i32, %c8_i32_87 : i32
    %279 = tpu.assume_multiple %278, 8 : i32
    %280 = arith.truncf %275 : vector<8x32xf32> to vector<8x32xbf16>
    %cst_88 = arith.constant dense<0.000000e+00> : vector<8x128xf32>
    %281 = tpu.matmul %280, %10, %cst_88 {dimension_numbers = #tpu.dot_dimension_numbers<[1], [0], [0], [1], [0, 0, 1, 1], [], []>} : vector<8x32xbf16>, vector<32x128xbf16>, vector<8x128xf32> -> vector<8x128xf32>
    %282 = arith.addf %281, %13 : vector<8x128xf32>
    %283 = arith.index_cast %279 : i32 to index
    %c0_89 = arith.constant 0 : index
    %284 = vector.load %arg12[%283, %c0_89] : memref<64x128xf32, #tpu.memory_space<vmem>>, vector<8x128xf32>
    %285 = arith.truncf %254 : vector<8x32xf32> to vector<8x32xbf16>
    %cst_90 = arith.constant dense<0.000000e+00> : vector<8x128xf32>
    %286 = tpu.matmul %285, %8, %cst_90 {dimension_numbers = #tpu.dot_dimension_numbers<[1], [0], [0], [1], [0, 0, 1, 1], [], []>} : vector<8x32xbf16>, vector<32x128xbf16>, vector<8x128xf32> -> vector<8x128xf32>
    %287 = arith.addf %284, %286 : vector<8x128xf32>
    %288 = arith.negf %287 : vector<8x128xf32>
    %289 = math.exp %288 : vector<8x128xf32>
    %cst_91 = arith.constant 1.000000e+00 : f32
    %290 = vector.broadcast %cst_91 : f32 to vector<8x128xf32>
    %291 = arith.addf %290, %289 : vector<8x128xf32>
    %292 = arith.divf %290, %291 : vector<8x128xf32>
    %293 = vector.extract_strided_slice %292 {offsets = [0, 0], sizes = [8, 32], strides = [1, 1]} : vector<8x128xf32> to vector<8x32xf32>
    %294 = vector.extract_strided_slice %292 {offsets = [0, 32], sizes = [8, 32], strides = [1, 1]} : vector<8x128xf32> to vector<8x32xf32>
    %295 = vector.extract_strided_slice %292 {offsets = [0, 64], sizes = [8, 32], strides = [1, 1]} : vector<8x128xf32> to vector<8x32xf32>
    %cst_92 = arith.constant 2.000000e+00 : f32
    %296 = vector.broadcast %cst_92 : f32 to vector<8x32xf32>
    %297 = arith.mulf %296, %295 : vector<8x32xf32>
    %cst_93 = arith.constant 1.000000e+00 : f32
    %298 = vector.broadcast %cst_93 : f32 to vector<8x32xf32>
    %299 = arith.subf %297, %298 : vector<8x32xf32>
    %300 = vector.extract_strided_slice %292 {offsets = [0, 96], sizes = [8, 32], strides = [1, 1]} : vector<8x128xf32> to vector<8x32xf32>
    %301 = arith.mulf %294, %252 : vector<8x32xf32>
    %302 = arith.mulf %293, %299 : vector<8x32xf32>
    %303 = arith.addf %301, %302 : vector<8x32xf32>
    %304 = math.tanh %303 : vector<8x32xf32>
    %305 = arith.mulf %300, %304 : vector<8x32xf32>
    %306 = arith.truncf %305 : vector<8x32xf32> to vector<8x32xbf16>
    %cst_94 = arith.constant dense<0.000000e+00> : vector<8x128xf32>
    %307 = tpu.matmul %306, %9, %cst_94 {dimension_numbers = #tpu.dot_dimension_numbers<[1], [0], [0], [1], [0, 0, 1, 1], [], []>} : vector<8x32xbf16>, vector<32x128xbf16>, vector<8x128xf32> -> vector<8x128xf32>
    %308 = arith.addf %282, %307 : vector<8x128xf32>
    %309 = arith.negf %308 : vector<8x128xf32>
    %310 = math.exp %309 : vector<8x128xf32>
    %cst_95 = arith.constant 1.000000e+00 : f32
    %311 = vector.broadcast %cst_95 : f32 to vector<8x128xf32>
    %312 = arith.addf %311, %310 : vector<8x128xf32>
    %313 = arith.divf %311, %312 : vector<8x128xf32>
    %314 = vector.extract_strided_slice %313 {offsets = [0, 0], sizes = [8, 32], strides = [1, 1]} : vector<8x128xf32> to vector<8x32xf32>
    %315 = vector.extract_strided_slice %313 {offsets = [0, 32], sizes = [8, 32], strides = [1, 1]} : vector<8x128xf32> to vector<8x32xf32>
    %316 = vector.extract_strided_slice %313 {offsets = [0, 64], sizes = [8, 32], strides = [1, 1]} : vector<8x128xf32> to vector<8x32xf32>
    %cst_96 = arith.constant 2.000000e+00 : f32
    %317 = vector.broadcast %cst_96 : f32 to vector<8x32xf32>
    %318 = arith.mulf %317, %316 : vector<8x32xf32>
    %cst_97 = arith.constant 1.000000e+00 : f32
    %319 = vector.broadcast %cst_97 : f32 to vector<8x32xf32>
    %320 = arith.subf %318, %319 : vector<8x32xf32>
    %321 = vector.extract_strided_slice %313 {offsets = [0, 96], sizes = [8, 32], strides = [1, 1]} : vector<8x128xf32> to vector<8x32xf32>
    %322 = arith.mulf %315, %273 : vector<8x32xf32>
    %323 = arith.mulf %314, %320 : vector<8x32xf32>
    %324 = arith.addf %322, %323 : vector<8x32xf32>
    %325 = math.tanh %324 : vector<8x32xf32>
    %326 = arith.mulf %321, %325 : vector<8x32xf32>
    %327 = arith.index_cast %279 : i32 to index
    %c0_98 = arith.constant 0 : index
    %328 = vector.load %arg13[%327, %c0_98] : memref<64x32xf32, #tpu.memory_space<vmem>>, vector<8x32xf32>
    tpu.vector_store %arg13[%327, %c0_98], %326 {strides = array<i32>} : memref<64x32xf32, #tpu.memory_space<vmem>>, vector<8x32xf32>,
    %c6_i32 = arith.constant 6 : i32
    %c8_i32_99 = arith.constant 8 : i32
    %329 = arith.muli %c6_i32, %c8_i32_99 : i32
    %330 = tpu.assume_multiple %329, 8 : i32
    %331 = arith.truncf %326 : vector<8x32xf32> to vector<8x32xbf16>
    %cst_100 = arith.constant dense<0.000000e+00> : vector<8x128xf32>
    %332 = tpu.matmul %331, %10, %cst_100 {dimension_numbers = #tpu.dot_dimension_numbers<[1], [0], [0], [1], [0, 0, 1, 1], [], []>} : vector<8x32xbf16>, vector<32x128xbf16>, vector<8x128xf32> -> vector<8x128xf32>
    %333 = arith.addf %332, %13 : vector<8x128xf32>
    %334 = arith.index_cast %330 : i32 to index
    %c0_101 = arith.constant 0 : index
    %335 = vector.load %arg12[%334, %c0_101] : memref<64x128xf32, #tpu.memory_space<vmem>>, vector<8x128xf32>
    %336 = arith.truncf %305 : vector<8x32xf32> to vector<8x32xbf16>
    %cst_102 = arith.constant dense<0.000000e+00> : vector<8x128xf32>
    %337 = tpu.matmul %336, %8, %cst_102 {dimension_numbers = #tpu.dot_dimension_numbers<[1], [0], [0], [1], [0, 0, 1, 1], [], []>} : vector<8x32xbf16>, vector<32x128xbf16>, vector<8x128xf32> -> vector<8x128xf32>
    %338 = arith.addf %335, %337 : vector<8x128xf32>
    %339 = arith.negf %338 : vector<8x128xf32>
    %340 = math.exp %339 : vector<8x128xf32>
    %cst_103 = arith.constant 1.000000e+00 : f32
    %341 = vector.broadcast %cst_103 : f32 to vector<8x128xf32>
    %342 = arith.addf %341, %340 : vector<8x128xf32>
    %343 = arith.divf %341, %342 : vector<8x128xf32>
    %344 = vector.extract_strided_slice %343 {offsets = [0, 0], sizes = [8, 32], strides = [1, 1]} : vector<8x128xf32> to vector<8x32xf32>
    %345 = vector.extract_strided_slice %343 {offsets = [0, 32], sizes = [8, 32], strides = [1, 1]} : vector<8x128xf32> to vector<8x32xf32>
    %346 = vector.extract_strided_slice %343 {offsets = [0, 64], sizes = [8, 32], strides = [1, 1]} : vector<8x128xf32> to vector<8x32xf32>
    %cst_104 = arith.constant 2.000000e+00 : f32
    %347 = vector.broadcast %cst_104 : f32 to vector<8x32xf32>
    %348 = arith.mulf %347, %346 : vector<8x32xf32>
    %cst_105 = arith.constant 1.000000e+00 : f32
    %349 = vector.broadcast %cst_105 : f32 to vector<8x32xf32>
    %350 = arith.subf %348, %349 : vector<8x32xf32>
    %351 = vector.extract_strided_slice %343 {offsets = [0, 96], sizes = [8, 32], strides = [1, 1]} : vector<8x128xf32> to vector<8x32xf32>
    %352 = arith.mulf %345, %303 : vector<8x32xf32>
    %353 = arith.mulf %344, %350 : vector<8x32xf32>
    %354 = arith.addf %352, %353 : vector<8x32xf32>
    %355 = math.tanh %354 : vector<8x32xf32>
    %356 = arith.mulf %351, %355 : vector<8x32xf32>
    %357 = arith.truncf %356 : vector<8x32xf32> to vector<8x32xbf16>
    %cst_106 = arith.constant dense<0.000000e+00> : vector<8x128xf32>
    %358 = tpu.matmul %357, %9, %cst_106 {dimension_numbers = #tpu.dot_dimension_numbers<[1], [0], [0], [1], [0, 0, 1, 1], [], []>} : vector<8x32xbf16>, vector<32x128xbf16>, vector<8x128xf32> -> vector<8x128xf32>
    %359 = arith.addf %333, %358 : vector<8x128xf32>
    %360 = arith.negf %359 : vector<8x128xf32>
    %361 = math.exp %360 : vector<8x128xf32>
    %cst_107 = arith.constant 1.000000e+00 : f32
    %362 = vector.broadcast %cst_107 : f32 to vector<8x128xf32>
    %363 = arith.addf %362, %361 : vector<8x128xf32>
    %364 = arith.divf %362, %363 : vector<8x128xf32>
    %365 = vector.extract_strided_slice %364 {offsets = [0, 0], sizes = [8, 32], strides = [1, 1]} : vector<8x128xf32> to vector<8x32xf32>
    %366 = vector.extract_strided_slice %364 {offsets = [0, 32], sizes = [8, 32], strides = [1, 1]} : vector<8x128xf32> to vector<8x32xf32>
    %367 = vector.extract_strided_slice %364 {offsets = [0, 64], sizes = [8, 32], strides = [1, 1]} : vector<8x128xf32> to vector<8x32xf32>
    %cst_108 = arith.constant 2.000000e+00 : f32
    %368 = vector.broadcast %cst_108 : f32 to vector<8x32xf32>
    %369 = arith.mulf %368, %367 : vector<8x32xf32>
    %cst_109 = arith.constant 1.000000e+00 : f32
    %370 = vector.broadcast %cst_109 : f32 to vector<8x32xf32>
    %371 = arith.subf %369, %370 : vector<8x32xf32>
    %372 = vector.extract_strided_slice %364 {offsets = [0, 96], sizes = [8, 32], strides = [1, 1]} : vector<8x128xf32> to vector<8x32xf32>
    %373 = arith.mulf %366, %324 : vector<8x32xf32>
    %374 = arith.mulf %365, %371 : vector<8x32xf32>
    %375 = arith.addf %373, %374 : vector<8x32xf32>
    %376 = math.tanh %375 : vector<8x32xf32>
    %377 = arith.mulf %372, %376 : vector<8x32xf32>
    %378 = arith.index_cast %330 : i32 to index
    %c0_110 = arith.constant 0 : index
    %379 = vector.load %arg13[%378, %c0_110] : memref<64x32xf32, #tpu.memory_space<vmem>>, vector<8x32xf32>
    tpu.vector_store %arg13[%378, %c0_110], %377 {strides = array<i32>} : memref<64x32xf32, #tpu.memory_space<vmem>>, vector<8x32xf32>,
    %c7_i32 = arith.constant 7 : i32
    %c8_i32_111 = arith.constant 8 : i32
    %380 = arith.muli %c7_i32, %c8_i32_111 : i32
    %381 = tpu.assume_multiple %380, 8 : i32
    %382 = arith.truncf %377 : vector<8x32xf32> to vector<8x32xbf16>
    %cst_112 = arith.constant dense<0.000000e+00> : vector<8x128xf32>
    %383 = tpu.matmul %382, %10, %cst_112 {dimension_numbers = #tpu.dot_dimension_numbers<[1], [0], [0], [1], [0, 0, 1, 1], [], []>} : vector<8x32xbf16>, vector<32x128xbf16>, vector<8x128xf32> -> vector<8x128xf32>
    %384 = arith.addf %383, %13 : vector<8x128xf32>
    %385 = arith.index_cast %381 : i32 to index
    %c0_113 = arith.constant 0 : index
    %386 = vector.load %arg12[%385, %c0_113] : memref<64x128xf32, #tpu.memory_space<vmem>>, vector<8x128xf32>
    %387 = arith.truncf %356 : vector<8x32xf32> to vector<8x32xbf16>
    %cst_114 = arith.constant dense<0.000000e+00> : vector<8x128xf32>
    %388 = tpu.matmul %387, %8, %cst_114 {dimension_numbers = #tpu.dot_dimension_numbers<[1], [0], [0], [1], [0, 0, 1, 1], [], []>} : vector<8x32xbf16>, vector<32x128xbf16>, vector<8x128xf32> -> vector<8x128xf32>
    %389 = arith.addf %386, %388 : vector<8x128xf32>
    %390 = arith.negf %389 : vector<8x128xf32>
    %391 = math.exp %390 : vector<8x128xf32>
    %cst_115 = arith.constant 1.000000e+00 : f32
    %392 = vector.broadcast %cst_115 : f32 to vector<8x128xf32>
    %393 = arith.addf %392, %391 : vector<8x128xf32>
    %394 = arith.divf %392, %393 : vector<8x128xf32>
    %395 = vector.extract_strided_slice %394 {offsets = [0, 0], sizes = [8, 32], strides = [1, 1]} : vector<8x128xf32> to vector<8x32xf32>
    %396 = vector.extract_strided_slice %394 {offsets = [0, 32], sizes = [8, 32], strides = [1, 1]} : vector<8x128xf32> to vector<8x32xf32>
    %397 = vector.extract_strided_slice %394 {offsets = [0, 64], sizes = [8, 32], strides = [1, 1]} : vector<8x128xf32> to vector<8x32xf32>
    %cst_116 = arith.constant 2.000000e+00 : f32
    %398 = vector.broadcast %cst_116 : f32 to vector<8x32xf32>
    %399 = arith.mulf %398, %397 : vector<8x32xf32>
    %cst_117 = arith.constant 1.000000e+00 : f32
    %400 = vector.broadcast %cst_117 : f32 to vector<8x32xf32>
    %401 = arith.subf %399, %400 : vector<8x32xf32>
    %402 = vector.extract_strided_slice %394 {offsets = [0, 96], sizes = [8, 32], strides = [1, 1]} : vector<8x128xf32> to vector<8x32xf32>
    %403 = arith.mulf %396, %354 : vector<8x32xf32>
    %404 = arith.mulf %395, %401 : vector<8x32xf32>
    %405 = arith.addf %403, %404 : vector<8x32xf32>
    %406 = math.tanh %405 : vector<8x32xf32>
    %407 = arith.mulf %402, %406 : vector<8x32xf32>
    %408 = arith.truncf %407 : vector<8x32xf32> to vector<8x32xbf16>
    %cst_118 = arith.constant dense<0.000000e+00> : vector<8x128xf32>
    %409 = tpu.matmul %408, %9, %cst_118 {dimension_numbers = #tpu.dot_dimension_numbers<[1], [0], [0], [1], [0, 0, 1, 1], [], []>} : vector<8x32xbf16>, vector<32x128xbf16>, vector<8x128xf32> -> vector<8x128xf32>
    %410 = arith.addf %384, %409 : vector<8x128xf32>
    %411 = arith.negf %410 : vector<8x128xf32>
    %412 = math.exp %411 : vector<8x128xf32>
    %cst_119 = arith.constant 1.000000e+00 : f32
    %413 = vector.broadcast %cst_119 : f32 to vector<8x128xf32>
    %414 = arith.addf %413, %412 : vector<8x128xf32>
    %415 = arith.divf %413, %414 : vector<8x128xf32>
    %416 = vector.extract_strided_slice %415 {offsets = [0, 0], sizes = [8, 32], strides = [1, 1]} : vector<8x128xf32> to vector<8x32xf32>
    %417 = vector.extract_strided_slice %415 {offsets = [0, 32], sizes = [8, 32], strides = [1, 1]} : vector<8x128xf32> to vector<8x32xf32>
    %418 = vector.extract_strided_slice %415 {offsets = [0, 64], sizes = [8, 32], strides = [1, 1]} : vector<8x128xf32> to vector<8x32xf32>
    %cst_120 = arith.constant 2.000000e+00 : f32
    %419 = vector.broadcast %cst_120 : f32 to vector<8x32xf32>
    %420 = arith.mulf %419, %418 : vector<8x32xf32>
    %cst_121 = arith.constant 1.000000e+00 : f32
    %421 = vector.broadcast %cst_121 : f32 to vector<8x32xf32>
    %422 = arith.subf %420, %421 : vector<8x32xf32>
    %423 = vector.extract_strided_slice %415 {offsets = [0, 96], sizes = [8, 32], strides = [1, 1]} : vector<8x128xf32> to vector<8x32xf32>
    %424 = arith.mulf %417, %375 : vector<8x32xf32>
    %425 = arith.mulf %416, %422 : vector<8x32xf32>
    %426 = arith.addf %424, %425 : vector<8x32xf32>
    %427 = math.tanh %426 : vector<8x32xf32>
    %428 = arith.mulf %423, %427 : vector<8x32xf32>
    %429 = arith.index_cast %381 : i32 to index
    %c0_122 = arith.constant 0 : index
    %430 = vector.load %arg13[%429, %c0_122] : memref<64x32xf32, #tpu.memory_space<vmem>>, vector<8x32xf32>
    tpu.vector_store %arg13[%429, %c0_122], %428 {strides = array<i32>} : memref<64x32xf32, #tpu.memory_space<vmem>>, vector<8x32xf32>,
    %c8_i32_123 = arith.constant 8 : i32
    %c0_124 = arith.constant 0 : index
    %c0_125 = arith.constant 0 : index
    %431 = vector.load %arg13[%c0_124, %c0_125] : memref<64x32xf32, #tpu.memory_space<vmem>>, vector<64x32xf32>
    %cst_126 = arith.constant dense<0.000000e+00> : vector<64x1xf32>
    %432 = tpu.matmul %431, %14, %cst_126 {dimension_numbers = #tpu.dot_dimension_numbers<[1], [0], [0], [1], [0, 0, 1, 1], [], []>} : vector<64x32xf32>, vector<32x1xf32>, vector<64x1xf32> -> vector<64x1xf32>
    %433 = arith.negf %432 : vector<64x1xf32>
    %434 = math.exp %433 : vector<64x1xf32>
    %cst_127 = arith.constant 1.000000e+00 : f32
    %435 = vector.broadcast %cst_127 : f32 to vector<64x1xf32>
    %436 = arith.addf %435, %434 : vector<64x1xf32>
    %437 = arith.divf %435, %436 : vector<64x1xf32>
    %c0_128 = arith.constant 0 : index
    %c0_129 = arith.constant 0 : index
    %438 = vector.load %arg11[%c0_128, %c0_129] : memref<64x1xf32, #tpu.memory_space<vmem>>, vector<64x1xf32>
    tpu.vector_store %arg11[%c0_128, %c0_129], %437 {strides = array<i32>} : memref<64x1xf32, #tpu.memory_space<vmem>>, vector<64x1xf32>,
    return
  }
  func.func @transform_0(%arg0: i32) -> (i32, i32, i32) {
    %c0_i32 = arith.constant 0 : i32
    %c0_i32_0 = arith.constant 0 : i32
    %c0_i32_1 = arith.constant 0 : i32
    %c0_i32_2 = arith.constant 0 : i32
    return %c0_i32, %c0_i32_0, %c0_i32_1 : i32, i32, i32
  }
  func.func @transform_1(%arg0: i32) -> (i32, i32, i32) {
    %c0_i32 = arith.constant 0 : i32
    %c0_i32_0 = arith.constant 0 : i32
    %c0_i32_1 = arith.constant 0 : i32
    %c0_i32_2 = arith.constant 0 : i32
    return %c0_i32, %c0_i32_0, %c0_i32_1 : i32, i32, i32
  }
  func.func @transform_2(%arg0: i32) -> (i32, i32) {
    %c0_i32 = arith.constant 0 : i32
    %c0_i32_0 = arith.constant 0 : i32
    %c0_i32_1 = arith.constant 0 : i32
    return %c0_i32, %c0_i32_0 : i32, i32
  }
  func.func @transform_3(%arg0: i32) -> (i32, i32) {
    %c0_i32 = arith.constant 0 : i32
    %c0_i32_0 = arith.constant 0 : i32
    %c0_i32_1 = arith.constant 0 : i32
    return %c0_i32, %c0_i32_0 : i32, i32
  }
  func.func @transform_4(%arg0: i32) -> (i32, i32) {
    %c0_i32 = arith.constant 0 : i32
    %c0_i32_0 = arith.constant 0 : i32
    %c0_i32_1 = arith.constant 0 : i32
    return %c0_i32, %c0_i32_0 : i32, i32
  }
  func.func @transform_5(%arg0: i32) -> (i32, i32) {
    %c0_i32 = arith.constant 0 : i32
    %c0_i32_0 = arith.constant 0 : i32
    %c0_i32_1 = arith.constant 0 : i32
    return %c0_i32, %c0_i32_0 : i32, i32
  }
  func.func @transform_6(%arg0: i32) -> (i32, i32) {
    %c0_i32 = arith.constant 0 : i32
    %c0_i32_0 = arith.constant 0 : i32
    %c0_i32_1 = arith.constant 0 : i32
    return %c0_i32, %c0_i32_0 : i32, i32
  }
  func.func @transform_7(%arg0: i32) -> (i32, i32) {
    %c0_i32 = arith.constant 0 : i32
    %c0_i32_0 = arith.constant 0 : i32
    %c0_i32_1 = arith.constant 0 : i32
    return %c0_i32, %c0_i32_0 : i32, i32
  }
  func.func @transform_8(%arg0: i32) -> (i32, i32) {
    %c0_i32 = arith.constant 0 : i32
    %c0_i32_0 = arith.constant 0 : i32
    %c0_i32_1 = arith.constant 0 : i32
    return %c0_i32, %c0_i32_0 : i32, i32
  }
  func.func @transform_9(%arg0: i32) -> (i32, i32) {
    %c0_i32 = arith.constant 0 : i32
    %c0_i32_0 = arith.constant 0 : i32
    %c0_i32_1 = arith.constant 0 : i32
    return %c0_i32, %c0_i32_0 : i32, i32
  }
  func.func @transform_10(%arg0: i32) -> (i32, i32) {
    %c0_i32 = arith.constant 0 : i32
    %c0_i32_0 = arith.constant 0 : i32
    %c0_i32_1 = arith.constant 0 : i32
    return %c0_i32, %c0_i32_0 : i32, i32
  }
}

</mosaic_0001>

<llo_original>
// kernel: tpu_custom_call.1
$region0: #{tpu_custom_call.1}
  #allocation0 [shape = 'u32[]', space=smem, size = 0x4, offset = 0x4, fixed_abs, tag = 'smem constant byte address 0x4 - core index']
  #allocation1 [shape = 'u32[144,128]{1,0:T(1,128)}', space=vmem, size = 0x12000, scoped, tag = 'internal scratch']
  #allocation2 [shape = 'f32[64,128]{1,0:T(8,128)}', space=vmem, size = 0x8000, scoped, tag = 'scratch operand']
  #allocation3 [shape = 'f32[64,32]{1,0:T(8,128)}', space=vmem, size = 0x8000, scoped, tag = 'scratch operand']
  %s0 = inlined_call_operand.vmem [shape: f32[2,8,32], index: 0, kind: input, shape index: {}]
  %s1 = inlined_call_operand.vmem [shape: f32[2,8,32], index: 1, kind: input, shape index: {}]
  %s2 = inlined_call_operand.vmem [shape: f32[64,4], index: 2, kind: input, shape index: {}]
  %s3 = inlined_call_operand.vmem [shape: bf16[4,128], index: 3, kind: input, shape index: {}]
  %s4 = inlined_call_operand.vmem [shape: bf16[32,128], index: 4, kind: input, shape index: {}]
  %s5 = inlined_call_operand.vmem [shape: f32[1,128], index: 5, kind: input, shape index: {}]
  %s6 = inlined_call_operand.vmem [shape: bf16[32,128], index: 6, kind: input, shape index: {}]
  %s7 = inlined_call_operand.vmem [shape: bf16[32,128], index: 7, kind: input, shape index: {}]
  %s8 = inlined_call_operand.vmem [shape: f32[1,128], index: 8, kind: input, shape index: {}]
  %s9 = inlined_call_operand.vmem [shape: f32[32,1], index: 9, kind: input, shape index: {}]
  %s10 = inlined_call_operand.vmem [shape: f32[64,1], index: 10, kind: output, shape index: {}]
  %s11 = sld [smem:[#allocation0]]
  $region50: #{tpu_custom_call.1} parent=0
    _
  %s13 = ssub.s32 1, %s11
  %s14 = scalar_select 0, %s13, %s11
  // Predicated region
  $region2: #{tpu_custom_call.1} parent=0 // pred_check
    _
  $region3: #{tpu_custom_call.1} parent=0 // pred_check_branch
    %16 = sbr.rel (0) target = $region5
  $region4: #{tpu_custom_call.1} parent=0 // pred_region
    _
  $region5: #{tpu_custom_call.1} parent=0 // pred_fallthru
    _
  // Predicated region
  $region6: #{tpu_custom_call.1} parent=0 // pred_check
    _
  $region7: #{tpu_custom_call.1} parent=0 // pred_check_branch
    %18 = sbr.rel (0) target = $region9
  $region8: #{tpu_custom_call.1} parent=0 // pred_region
    _
  $region9: #{tpu_custom_call.1} parent=0 // pred_fallthru
    _
  // Predicated region
  $region10: #{tpu_custom_call.1} parent=0 // pred_check
    _
  $region11: #{tpu_custom_call.1} parent=0 // pred_check_branch
    %20 = sbr.rel (0) target = $region13
  $region12: #{tpu_custom_call.1} parent=0 // pred_region
    _
  $region13: #{tpu_custom_call.1} parent=0 // pred_fallthru
    _
  // Predicated region
  $region14: #{tpu_custom_call.1} parent=0 // pred_check
    _
  $region15: #{tpu_custom_call.1} parent=0 // pred_check_branch
    %22 = sbr.rel (0) target = $region17
  $region16: #{tpu_custom_call.1} parent=0 // pred_region
    _
  $region17: #{tpu_custom_call.1} parent=0 // pred_fallthru
    _
  // Predicated region
  $region18: #{tpu_custom_call.1} parent=0 // pred_check
    _
  $region19: #{tpu_custom_call.1} parent=0 // pred_check_branch
    %24 = sbr.rel (0) target = $region21
  $region20: #{tpu_custom_call.1} parent=0 // pred_region
    _
  $region21: #{tpu_custom_call.1} parent=0 // pred_fallthru
    _
  // Predicated region
  $region22: #{tpu_custom_call.1} parent=0 // pred_check
    _
  $region23: #{tpu_custom_call.1} parent=0 // pred_check_branch
    %26 = sbr.rel (0) target = $region25
  $region24: #{tpu_custom_call.1} parent=0 // pred_region
    _
  $region25: #{tpu_custom_call.1} parent=0 // pred_fallthru
    _
  // Predicated region
  $region26: #{tpu_custom_call.1} parent=0 // pred_check
    _
  $region27: #{tpu_custom_call.1} parent=0 // pred_check_branch
    %28 = sbr.rel (0) target = $region29
  $region28: #{tpu_custom_call.1} parent=0 // pred_region
    _
  $region29: #{tpu_custom_call.1} parent=0 // pred_fallthru
    _
  // Predicated region
  $region30: #{tpu_custom_call.1} parent=0 // pred_check
    _
  $region31: #{tpu_custom_call.1} parent=0 // pred_check_branch
    %30 = sbr.rel (0) target = $region33
  $region32: #{tpu_custom_call.1} parent=0 // pred_region
    _
  $region33: #{tpu_custom_call.1} parent=0 // pred_fallthru
    _
  // Predicated region
  $region34: #{tpu_custom_call.1} parent=0 // pred_check
    _
  $region35: #{tpu_custom_call.1} parent=0 // pred_check_branch
    %32 = sbr.rel (0) target = $region37
  $region36: #{tpu_custom_call.1} parent=0 // pred_region
    _
  $region37: #{tpu_custom_call.1} parent=0 // pred_fallthru
    _
  // Predicated region
  $region38: #{tpu_custom_call.1} parent=0 // pred_check
    _
  $region39: #{tpu_custom_call.1} parent=0 // pred_check_branch
    %34 = sbr.rel (0) target = $region41
  $region40: #{tpu_custom_call.1} parent=0 // pred_region
    _
  $region41: #{tpu_custom_call.1} parent=0 // pred_fallthru
    _
  %v36 = vld [vmem:[%s2] sm:$0xff]
  %v37 = vld [vmem:[%s2 + $0x8] sm:$0xff]
  %v38 = vld [vmem:[%s2 + $0x10] sm:$0xff]
  %v39 = vld [vmem:[%s2 + $0x18] sm:$0xff]
  %v40 = vld [vmem:[%s2 + $0x20] sm:$0xff]
  %v41 = vld [vmem:[%s2 + $0x28] sm:$0xff]
  %v42 = vld [vmem:[%s2 + $0x30] sm:$0xff]
  %v43 = vld [vmem:[%s2 + $0x38] sm:$0xff]
  %v44 = vpack.c.bf16 %v37, %v36
  %v45 = vpack.c.bf16 %v39, %v38
  %v46 = vpack.c.bf16 %v41, %v40
  %v47 = vpack.c.bf16 %v43, %v42
  %v48 = vld [vmem:[%s3] sm:$0x3]
  %v49 = vld [vmem:[%s5] sm:$0x1]
  %v51 = vlaneseq
  %v52 = vshrl.u32 %v51, 7
  %v53 = vsub.s32 0, %v52
  %v54 = vrot.slane %v49, %v53
  %vm56 = vcmask 31744
  %v58 = vsel %vm56, %v44, 0
  %v61 = vsel %vm56, %v45, 0
  %v64 = vsel %vm56, %v46, 0
  %v67 = vsel %vm56, %v47, 0
  %vm69 = vcmask 1041408
  %v71 = vsel %vm69, %v48, 0
  %73 = vmatprep.subr.bf16.mxu0 0
  %74 = vmatpush1.bf16.msra.mxu0 %v71
  %75 = vmatprep.subr.bf16.mxu0 0
  %76 = vmatpush1.bf16.msra.mxu0 0
  %77 = vmatprep.subr.bf16.mxu0 0
  %78 = vmatpush1.bf16.msra.mxu0 0
  %79 = vmatprep.subr.bf16.mxu0 0
  %80 = vmatpush1.bf16.msra.mxu0 0
  %81 = vmatprep.subr.bf16.mxu0 0
  %82 = vmatpush1.bf16.msra.mxu0 0
  %83 = vmatprep.subr.bf16.mxu0 0
  %84 = vmatpush1.bf16.msra.mxu0 0
  %85 = vmatprep.subr.bf16.mxu0 0
  %86 = vmatpush1.bf16.msra.mxu0 0
  %87 = vmatprep.subr.bf16.mxu0 0
  %88 = vmatpush1.bf16.msra.mxu0 0
  %89 = vmatprep.subr.bf16.mxu0 0
  %90 = vmatpush1.bf16.msra.mxu0 0
  %91 = vmatprep.subr.bf16.mxu0 0
  %92 = vmatpush1.bf16.msra.mxu0 0
  %93 = vmatprep.subr.bf16.mxu0 0
  %94 = vmatpush1.bf16.msra.mxu0 0
  %95 = vmatprep.subr.bf16.mxu0 0
  %96 = vmatpush1.bf16.msra.mxu0 0
  %97 = vmatprep.subr.bf16.mxu0 0
  %98 = vmatpush1.bf16.msra.mxu0 0
  %99 = vmatprep.subr.bf16.mxu0 0
  %100 = vmatpush1.bf16.msra.mxu0 0
  %101 = vmatprep.subr.bf16.mxu0 0
  %102 = vmatpush1.bf16.msra.mxu0 0
  %103 = vmatprep.subr.bf16.mxu0 0
  %104 = vmatpush1.bf16.msra.mxu0 0
  %105 = vmatprep.mubr.bf16.mxu0 0
  %106 = vmatmul.mubr.bf16.gmra.mrb[0].mxu0 %v58
  %v107 = vpop.f32.mrb[0].mxu0
  %v108 = vadd.f32 %v54, %v107
  %v109 = vpop.f32.mrb[0].mxu0
  %v110 = vpop.f32.mrb[0].mxu0
  %v111 = vadd.f32 %v54, %v110
  %v112 = vpop.f32.mrb[0].mxu0
  %113 = vmatprep.mubr.bf16.mxu0 0
  %114 = vmatmul.mubr.bf16.gmra.mrb[0].mxu0 %v61
  %v115 = vpop.f32.mrb[0].mxu0
  %v116 = vadd.f32 %v54, %v115
  %v117 = vpop.f32.mrb[0].mxu0
  %v118 = vpop.f32.mrb[0].mxu0
  %v119 = vadd.f32 %v54, %v118
  %v120 = vpop.f32.mrb[0].mxu0
  %121 = vmatprep.mubr.bf16.mxu0 0
  %122 = vmatmul.mubr.bf16.gmra.mrb[0].mxu0 %v64
  %v123 = vpop.f32.mrb[0].mxu0
  %v124 = vadd.f32 %v54, %v123
  %v125 = vpop.f32.mrb[0].mxu0
  %v126 = vpop.f32.mrb[0].mxu0
  %v127 = vadd.f32 %v54, %v126
  %v128 = vpop.f32.mrb[0].mxu0
  %129 = vmatprep.mubr.bf16.mxu0 0
  %130 = vmatmul.mubr.bf16.gmra.mrb[0].mxu0 %v67
  %v131 = vpop.f32.mrb[0].mxu0
  %v132 = vadd.f32 %v54, %v131
  %v133 = vpop.f32.mrb[0].mxu0
  %v134 = vpop.f32.mrb[0].mxu0
  %v135 = vadd.f32 %v54, %v134
  %v136 = vpop.f32.mrb[0].mxu0
  %137 = vdwg.mxu0
  %138 = vst [vmem:[#allocation2] sm:$0xff] %v108
  %139 = vst [vmem:[#allocation2 + $0x8] sm:$0xff] %v111
  %140 = vst [vmem:[#allocation2 + $0x10] sm:$0xff] %v116
  %141 = vst [vmem:[#allocation2 + $0x18] sm:$0xff] %v119
  %142 = vst [vmem:[#allocation2 + $0x20] sm:$0xff] %v124
  %143 = vst [vmem:[#allocation2 + $0x28] sm:$0xff] %v127
  %144 = vst [vmem:[#allocation2 + $0x30] sm:$0xff] %v132
  %145 = vst [vmem:[#allocation2 + $0x38] sm:$0xff] %v135
  %v146 = vld [vmem:[%s4] sm:$0xf]
  %v147 = vld [vmem:[%s4 + $0x4] sm:$0xf]
  %v148 = vld [vmem:[%s4 + $0x8] sm:$0xf]
  %v149 = vld [vmem:[%s4 + $0xc] sm:$0xf]
  %v150 = vld [vmem:[%s6] sm:$0xf]
  %v151 = vld [vmem:[%s6 + $0x4] sm:$0xf]
  %v152 = vld [vmem:[%s6 + $0x8] sm:$0xf]
  %v153 = vld [vmem:[%s6 + $0xc] sm:$0xf]
  %v154 = vld [vmem:[%s7] sm:$0xf]
  %v155 = vld [vmem:[%s7 + $0x4] sm:$0xf]
  %v156 = vld [vmem:[%s7 + $0x8] sm:$0xf]
  %v157 = vld [vmem:[%s7 + $0xc] sm:$0xf]
  %v158 = vld [vmem:[%s8] sm:$0x1]
  %v160 = vlaneseq
  %v161 = vshrl.u32 %v160, 7
  %v162 = vsub.s32 0, %v161
  %v163 = vrot.slane %v158, %v162
  %v165 = vld [vmem:[%s9] sm:$0xff]
  %v166 = vld [vmem:[%s9 + $0x8] sm:$0xff]
  %v167 = vld [vmem:[%s9 + $0x10] sm:$0xff]
  %v168 = vld [vmem:[%s9 + $0x18] sm:$0xff]
  %v169 = vld [vmem:[%s0] sm:$0xff]
  %s170 = scalar_lea.vmem %s0, 8
  %v171 = vld [vmem:[%s170] sm:$0xff]
  %v172 = vld [vmem:[%s1] sm:$0xff]
  %s173 = scalar_lea.vmem %s1, 8
  %v174 = vld [vmem:[%s173] sm:$0xff]
  %v175 = vpack.c.bf16 %v171, %v171
  %v180 = vunpack.c.l.b16 %v154
  %v181 = vunpack.c.l.b16 %v155
  %v182 = vunpack.c.l.b16 %v156
  %v183 = vunpack.c.l.b16 %v157
  %v184 = vpack.c.b16 %v181, %v180
  %v185 = vpack.c.b16 %v183, %v182
  %vm188 = vcmask 261120
  %v190 = vsel %vm188, %v175, 0
  %192 = vmatprep.subr.bf16.mxu0 0
  %193 = vmatpush1.bf16.msra.mxu0 %v184
  %194 = vmatprep.subr.bf16.mxu0 0
  %195 = vmatpush1.bf16.msra.mxu0 %v185
  %196 = vmatprep.subr.bf16.mxu0 0
  %197 = vmatpush1.bf16.msra.mxu0 0
  %198 = vmatprep.subr.bf16.mxu0 0
  %199 = vmatpush1.bf16.msra.mxu0 0
  %200 = vmatprep.subr.bf16.mxu0 0
  %201 = vmatpush1.bf16.msra.mxu0 0
  %202 = vmatprep.subr.bf16.mxu0 0
  %203 = vmatpush1.bf16.msra.mxu0 0
  %204 = vmatprep.subr.bf16.mxu0 0
  %205 = vmatpush1.bf16.msra.mxu0 0
  %206 = vmatprep.subr.bf16.mxu0 0
  %207 = vmatpush1.bf16.msra.mxu0 0
  %208 = vmatprep.subr.bf16.mxu0 0
  %209 = vmatpush1.bf16.msra.mxu0 0
  %210 = vmatprep.subr.bf16.mxu0 0
  %211 = vmatpush1.bf16.msra.mxu0 0
  %212 = vmatprep.subr.bf16.mxu0 0
  %213 = vmatpush1.bf16.msra.mxu0 0
  %214 = vmatprep.subr.bf16.mxu0 0
  %215 = vmatpush1.bf16.msra.mxu0 0
  %216 = vmatprep.subr.bf16.mxu0 0
  %217 = vmatpush1.bf16.msra.mxu0 0
  %218 = vmatprep.subr.bf16.mxu0 0
  %219 = vmatpush1.bf16.msra.mxu0 0
  %220 = vmatprep.subr.bf16.mxu0 0
  %221 = vmatpush1.bf16.msra.mxu0 0
  %222 = vmatprep.subr.bf16.mxu0 0
  %223 = vmatpush1.bf16.msra.mxu0 0
  %224 = vmatprep.mubr.bf16.mxu0 0
  %225 = vmatmul.mubr.bf16.gmra.mrb[0].mxu0 %v190
  %v226 = vpop.f32.mrb[0].mxu0
  %v227 = vadd.f32 %v163, %v226
  %v228 = vpop.f32.mrb[0].mxu0
  %v229 = vpop.f32.mrb[0].mxu0
  %v230 = vpop.f32.mrb[0].mxu0
  %231 = vdwg.mxu0
  %v232 = vld [vmem:[#allocation2] sm:$0xff]
  %v233 = vpack.c.bf16 %v169, %v169
  %v238 = vunpack.c.l.b16 %v146
  %v239 = vunpack.c.l.b16 %v147
  %v240 = vunpack.c.l.b16 %v148
  %v241 = vunpack.c.l.b16 %v149
  %v242 = vpack.c.b16 %v239, %v238
  %v243 = vpack.c.b16 %v241, %v240
  %v247 = vsel %vm188, %v233, 0
  %249 = vmatprep.subr.bf16.mxu0 0
  %250 = vmatpush1.bf16.msra.mxu0 %v242
  %251 = vmatprep.subr.bf16.mxu0 0
  %252 = vmatpush1.bf16.msra.mxu0 %v243
  %253 = vmatprep.subr.bf16.mxu0 0
  %254 = vmatpush1.bf16.msra.mxu0 0
  %255 = vmatprep.subr.bf16.mxu0 0
  %256 = vmatpush1.bf16.msra.mxu0 0
  %257 = vmatprep.subr.bf16.mxu0 0
  %258 = vmatpush1.bf16.msra.mxu0 0
  %259 = vmatprep.subr.bf16.mxu0 0
  %260 = vmatpush1.bf16.msra.mxu0 0
  %261 = vmatprep.subr.bf16.mxu0 0
  %262 = vmatpush1.bf16.msra.mxu0 0
  %263 = vmatprep.subr.bf16.mxu0 0
  %264 = vmatpush1.bf16.msra.mxu0 0
  %265 = vmatprep.subr.bf16.mxu0 0
  %266 = vmatpush1.bf16.msra.mxu0 0
  %267 = vmatprep.subr.bf16.mxu0 0
  %268 = vmatpush1.bf16.msra.mxu0 0
  %269 = vmatprep.subr.bf16.mxu0 0
  %270 = vmatpush1.bf16.msra.mxu0 0
  %271 = vmatprep.subr.bf16.mxu0 0
  %272 = vmatpush1.bf16.msra.mxu0 0
  %273 = vmatprep.subr.bf16.mxu0 0
  %274 = vmatpush1.bf16.msra.mxu0 0
  %275 = vmatprep.subr.bf16.mxu0 0
  %276 = vmatpush1.bf16.msra.mxu0 0
  %277 = vmatprep.subr.bf16.mxu0 0
  %278 = vmatpush1.bf16.msra.mxu0 0
  %279 = vmatprep.subr.bf16.mxu0 0
  %280 = vmatpush1.bf16.msra.mxu0 0
  %281 = vmatprep.mubr.bf16.mxu0 0
  %282 = vmatmul.mubr.bf16.gmra.mrb[0].mxu0 %v247
  %v283 = vpop.f32.mrb[0].mxu0
  %v284 = vadd.f32 0.0, %v283
  %v285 = vpop.f32.mrb[0].mxu0
  %v286 = vpop.f32.mrb[0].mxu0
  %v287 = vpop.f32.mrb[0].mxu0
  %288 = vdwg.mxu0
  %v289 = vadd.f32 %v232, %v284
  %v290 = vxor.u32 %v289, 2147483648
  %v291 = vmul.f32 %v290, 1.442695
  %v292 = vpow.pop %v291
  %v293 = vadd.f32 %v292, 1.0
  %v294 = vrcp.pop %v293
  %v295 = vmul.f32 1.0, %v294
  %v296 = vmul.f32 %v295, 2.0
  %v297 = vsub.f32 %v296, 1.0
  %299 = vrot.lane.b32.xlu0 %v172, 32
  %v300 = vpop.permute.xlu0 %299
  %v302 = vmul.f32 %v295, %v300
  %304 = vrot.lane.b32.xlu0 %v297, 64
  %v305 = vpop.permute.xlu0 %304
  %v307 = vmul.f32 %v295, %v305
  %309 = vrot.lane.b32.xlu0 %v307, 32
  %v310 = vpop.permute.xlu0 %309
  %v312 = vadd.f32 %v302, %v310
  %v313 = vtanh.pop %v312
  %315 = vrot.lane.b32.xlu0 %v313, 64
  %v316 = vpop.permute.xlu0 %315
  %v318 = vmul.f32 %v295, %v316
  %v319 = vpack.c.bf16 %v318, %v318
  %321 = vrot.lane.b32.xlu0 %v319, 32
  %v322 = vpop.permute.xlu0 %321
  %v327 = vunpack.c.l.b16 %v150
  %v328 = vunpack.c.l.b16 %v151
  %v329 = vunpack.c.l.b16 %v152
  %v330 = vunpack.c.l.b16 %v153
  %v331 = vpack.c.b16 %v328, %v327
  %v332 = vpack.c.b16 %v330, %v329
  %v336 = vsel %vm188, %v322, 0
  %338 = vmatprep.subr.bf16.mxu0 0
  %339 = vmatpush1.bf16.msra.mxu0 %v331
  %340 = vmatprep.subr.bf16.mxu0 0
  %341 = vmatpush1.bf16.msra.mxu0 %v332
  %342 = vmatprep.subr.bf16.mxu0 0
  %343 = vmatpush1.bf16.msra.mxu0 0
  %344 = vmatprep.subr.bf16.mxu0 0
  %345 = vmatpush1.bf16.msra.mxu0 0
  %346 = vmatprep.subr.bf16.mxu0 0
  %347 = vmatpush1.bf16.msra.mxu0 0
  %348 = vmatprep.subr.bf16.mxu0 0
  %349 = vmatpush1.bf16.msra.mxu0 0
  %350 = vmatprep.subr.bf16.mxu0 0
  %351 = vmatpush1.bf16.msra.mxu0 0
  %352 = vmatprep.subr.bf16.mxu0 0
  %353 = vmatpush1.bf16.msra.mxu0 0
  %354 = vmatprep.subr.bf16.mxu0 0
  %355 = vmatpush1.bf16.msra.mxu0 0
  %356 = vmatprep.subr.bf16.mxu0 0
  %357 = vmatpush1.bf16.msra.mxu0 0
  %358 = vmatprep.subr.bf16.mxu0 0
  %359 = vmatpush1.bf16.msra.mxu0 0
  %360 = vmatprep.subr.bf16.mxu0 0
  %361 = vmatpush1.bf16.msra.mxu0 0
  %362 = vmatprep.subr.bf16.mxu0 0
  %363 = vmatpush1.bf16.msra.mxu0 0
  %364 = vmatprep.subr.bf16.mxu0 0
  %365 = vmatpush1.bf16.msra.mxu0 0
  %366 = vmatprep.subr.bf16.mxu0 0
  %367 = vmatpush1.bf16.msra.mxu0 0
  %368 = vmatprep.subr.bf16.mxu0 0
  %369 = vmatpush1.bf16.msra.mxu0 0
  %370 = vmatprep.mubr.bf16.mxu0 0
  %371 = vmatmul.mubr.bf16.gmra.mrb[0].mxu0 %v336
  %v372 = vpop.f32.mrb[0].mxu0
  %v373 = vadd.f32 0.0, %v372
  %v374 = vpop.f32.mrb[0].mxu0
  %v375 = vpop.f32.mrb[0].mxu0
  %v376 = vpop.f32.mrb[0].mxu0
  %377 = vdwg.mxu0
  %v378 = vadd.f32 %v227, %v373
  %v379 = vxor.u32 %v378, 2147483648
  %v380 = vmul.f32 %v379, 1.442695
  %v381 = vpow.pop %v380
  %v382 = vadd.f32 %v381, 1.0
  %v383 = vrcp.pop %v382
  %v384 = vmul.f32 1.0, %v383
  %v385 = vmul.f32 %v384, 2.0
  %v386 = vsub.f32 %v385, 1.0
  %388 = vrot.lane.b32.xlu0 %v174, 32
  %v389 = vpop.permute.xlu0 %388
  %v391 = vmul.f32 %v384, %v389
  %393 = vrot.lane.b32.xlu0 %v386, 64
  %v394 = vpop.permute.xlu0 %393
  %v396 = vmul.f32 %v384, %v394
  %398 = vrot.lane.b32.xlu0 %v396, 32
  %v399 = vpop.permute.xlu0 %398
  %v401 = vadd.f32 %v391, %v399
  %v402 = vtanh.pop %v401
  %404 = vrot.lane.b32.xlu0 %v402, 64
  %v405 = vpop.permute.xlu0 %404
  %v407 = vmul.f32 %v384, %v405
  %409 = vrot.lane.b32.xlu0 %v407, 32
  %v410 = vpop.permute.xlu0 %409
  %412 = vst.msk [vmem:[#allocation3] sm:$0xff] %vm188, %v410
  %v413 = vpack.c.bf16 %v407, %v407
  %415 = vrot.lane.b32.xlu0 %v413, 32
  %v416 = vpop.permute.xlu0 %415
  %v418 = vsel %vm188, %v416, 0
  %420 = vmatprep.subr.bf16.mxu0 0
  %421 = vmatpush1.bf16.msra.mxu0 %v184
  %422 = vmatprep.subr.bf16.mxu0 0
  %423 = vmatpush1.bf16.msra.mxu0 %v185
  %424 = vmatprep.subr.bf16.mxu0 0
  %425 = vmatpush1.bf16.msra.mxu0 0
  %426 = vmatprep.subr.bf16.mxu0 0
  %427 = vmatpush1.bf16.msra.mxu0 0
  %428 = vmatprep.subr.bf16.mxu0 0
  %429 = vmatpush1.bf16.msra.mxu0 0
  %430 = vmatprep.subr.bf16.mxu0 0
  %431 = vmatpush1.bf16.msra.mxu0 0
  %432 = vmatprep.subr.bf16.mxu0 0
  %433 = vmatpush1.bf16.msra.mxu0 0
  %434 = vmatprep.subr.bf16.mxu0 0
  %435 = vmatpush1.bf16.msra.mxu0 0
  %436 = vmatprep.subr.bf16.mxu0 0
  %437 = vmatpush1.bf16.msra.mxu0 0
  %438 = vmatprep.subr.bf16.mxu0 0
  %439 = vmatpush1.bf16.msra.mxu0 0
  %440 = vmatprep.subr.bf16.mxu0 0
  %441 = vmatpush1.bf16.msra.mxu0 0
  %442 = vmatprep.subr.bf16.mxu0 0
  %443 = vmatpush1.bf16.msra.mxu0 0
  %444 = vmatprep.subr.bf16.mxu0 0
  %445 = vmatpush1.bf16.msra.mxu0 0
  %446 = vmatprep.subr.bf16.mxu0 0
  %447 = vmatpush1.bf16.msra.mxu0 0
  %448 = vmatprep.subr.bf16.mxu0 0
  %449 = vmatpush1.bf16.msra.mxu0 0
  %450 = vmatprep.subr.bf16.mxu0 0
  %451 = vmatpush1.bf16.msra.mxu0 0
  %452 = vmatprep.mubr.bf16.mxu0 0
  %453 = vmatmul.mubr.bf16.gmra.mrb[0].mxu0 %v418
  %v454 = vpop.f32.mrb[0].mxu0
  %v455 = vadd.f32 %v163, %v454
  %v456 = vpop.f32.mrb[0].mxu0
  %v457 = vpop.f32.mrb[0].mxu0
  %v458 = vpop.f32.mrb[0].mxu0
  %459 = vdwg.mxu0
  %s460 = scalar_lea.vmem [#allocation2], 8
  %v461 = vld [vmem:[%s460] sm:$0xff]
  %462 = vmatprep.subr.bf16.mxu0 0
  %463 = vmatpush1.bf16.msra.mxu0 %v242
  %464 = vmatprep.subr.bf16.mxu0 0
  %465 = vmatpush1.bf16.msra.mxu0 %v243
  %466 = vmatprep.subr.bf16.mxu0 0
  %467 = vmatpush1.bf16.msra.mxu0 0
  %468 = vmatprep.subr.bf16.mxu0 0
  %469 = vmatpush1.bf16.msra.mxu0 0
  %470 = vmatprep.subr.bf16.mxu0 0
  %471 = vmatpush1.bf16.msra.mxu0 0
  %472 = vmatprep.subr.bf16.mxu0 0
  %473 = vmatpush1.bf16.msra.mxu0 0
  %474 = vmatprep.subr.bf16.mxu0 0
  %475 = vmatpush1.bf16.msra.mxu0 0
  %476 = vmatprep.subr.bf16.mxu0 0
  %477 = vmatpush1.bf16.msra.mxu0 0
  %478 = vmatprep.subr.bf16.mxu0 0
  %479 = vmatpush1.bf16.msra.mxu0 0
  %480 = vmatprep.subr.bf16.mxu0 0
  %481 = vmatpush1.bf16.msra.mxu0 0
  %482 = vmatprep.subr.bf16.mxu0 0
  %483 = vmatpush1.bf16.msra.mxu0 0
  %484 = vmatprep.subr.bf16.mxu0 0
  %485 = vmatpush1.bf16.msra.mxu0 0
  %486 = vmatprep.subr.bf16.mxu0 0
  %487 = vmatpush1.bf16.msra.mxu0 0
  %488 = vmatprep.subr.bf16.mxu0 0
  %489 = vmatpush1.bf16.msra.mxu0 0
  %490 = vmatprep.subr.bf16.mxu0 0
  %491 = vmatpush1.bf16.msra.mxu0 0
  %492 = vmatprep.subr.bf16.mxu0 0
  %493 = vmatpush1.bf16.msra.mxu0 0
  %494 = vmatprep.mubr.bf16.mxu0 0
  %495 = vmatmul.mubr.bf16.gmra.mrb[0].mxu0 %v336
  %v496 = vpop.f32.mrb[0].mxu0
  %v497 = vadd.f32 0.0, %v496
  %v498 = vpop.f32.mrb[0].mxu0
  %v499 = vpop.f32.mrb[0].mxu0
  %v500 = vpop.f32.mrb[0].mxu0
  %501 = vdwg.mxu0
  %v502 = vadd.f32 %v461, %v497
  %v503 = vxor.u32 %v502, 2147483648
  %v504 = vmul.f32 %v503, 1.442695
  %v505 = vpow.pop %v504
  %v506 = vadd.f32 %v505, 1.0
  %v507 = vrcp.pop %v506
  %v508 = vmul.f32 1.0, %v507
  %v509 = vmul.f32 %v508, 2.0
  %v510 = vsub.f32 %v509, 1.0
  %v511 = vmul.f32 %v508, %v312
  %513 = vrot.lane.b32.xlu0 %v510, 64
  %v514 = vpop.permute.xlu0 %513
  %v516 = vmul.f32 %v508, %v514
  %518 = vrot.lane.b32.xlu0 %v516, 32
  %v519 = vpop.permute.xlu0 %518
  %v521 = vadd.f32 %v511, %v519
  %v522 = vtanh.pop %v521
  %524 = vrot.lane.b32.xlu0 %v522, 64
  %v525 = vpop.permute.xlu0 %524
  %v527 = vmul.f32 %v508, %v525
  %v528 = vpack.c.bf16 %v527, %v527
  %530 = vrot.lane.b32.xlu0 %v528, 32
  %v531 = vpop.permute.xlu0 %530
  %v533 = vsel %vm188, %v531, 0
  %535 = vmatprep.subr.bf16.mxu0 0
  %536 = vmatpush1.bf16.msra.mxu0 %v331
  %537 = vmatprep.subr.bf16.mxu0 0
  %538 = vmatpush1.bf16.msra.mxu0 %v332
  %539 = vmatprep.subr.bf16.mxu0 0
  %540 = vmatpush1.bf16.msra.mxu0 0
  %541 = vmatprep.subr.bf16.mxu0 0
  %542 = vmatpush1.bf16.msra.mxu0 0
  %543 = vmatprep.subr.bf16.mxu0 0
  %544 = vmatpush1.bf16.msra.mxu0 0
  %545 = vmatprep.subr.bf16.mxu0 0
  %546 = vmatpush1.bf16.msra.mxu0 0
  %547 = vmatprep.subr.bf16.mxu0 0
  %548 = vmatpush1.bf16.msra.mxu0 0
  %549 = vmatprep.subr.bf16.mxu0 0
  %550 = vmatpush1.bf16.msra.mxu0 0
  %551 = vmatprep.subr.bf16.mxu0 0
  %552 = vmatpush1.bf16.msra.mxu0 0
  %553 = vmatprep.subr.bf16.mxu0 0
  %554 = vmatpush1.bf16.msra.mxu0 0
  %555 = vmatprep.subr.bf16.mxu0 0
  %556 = vmatpush1.bf16.msra.mxu0 0
  %557 = vmatprep.subr.bf16.mxu0 0
  %558 = vmatpush1.bf16.msra.mxu0 0
  %559 = vmatprep.subr.bf16.mxu0 0
  %560 = vmatpush1.bf16.msra.mxu0 0
  %561 = vmatprep.subr.bf16.mxu0 0
  %562 = vmatpush1.bf16.msra.mxu0 0
  %563 = vmatprep.subr.bf16.mxu0 0
  %564 = vmatpush1.bf16.msra.mxu0 0
  %565 = vmatprep.subr.bf16.mxu0 0
  %566 = vmatpush1.bf16.msra.mxu0 0
  %567 = vmatprep.mubr.bf16.mxu0 0
  %568 = vmatmul.mubr.bf16.gmra.mrb[0].mxu0 %v533
  %v569 = vpop.f32.mrb[0].mxu0
  %v570 = vadd.f32 0.0, %v569
  %v571 = vpop.f32.mrb[0].mxu0
  %v572 = vpop.f32.mrb[0].mxu0
  %v573 = vpop.f32.mrb[0].mxu0
  %574 = vdwg.mxu0
  %v575 = vadd.f32 %v455, %v570
  %v576 = vxor.u32 %v575, 2147483648
  %v577 = vmul.f32 %v576, 1.442695
  %v578 = vpow.pop %v577
  %v579 = vadd.f32 %v578, 1.0
  %v580 = vrcp.pop %v579
  %v581 = vmul.f32 1.0, %v580
  %v582 = vmul.f32 %v581, 2.0
  %v583 = vsub.f32 %v582, 1.0
  %v584 = vmul.f32 %v581, %v401
  %586 = vrot.lane.b32.xlu0 %v583, 64
  %v587 = vpop.permute.xlu0 %586
  %v589 = vmul.f32 %v581, %v587
  %591 = vrot.lane.b32.xlu0 %v589, 32
  %v592 = vpop.permute.xlu0 %591
  %v594 = vadd.f32 %v584, %v592
  %v595 = vtanh.pop %v594
  %597 = vrot.lane.b32.xlu0 %v595, 64
  %v598 = vpop.permute.xlu0 %597
  %v600 = vmul.f32 %v581, %v598
  %602 = vrot.lane.b32.xlu0 %v600, 32
  %v603 = vpop.permute.xlu0 %602
  %s605 = scalar_lea.vmem [#allocation3], 8
  %606 = vst.msk [vmem:[%s605] sm:$0xff] %vm188, %v603
  %v607 = vpack.c.bf16 %v600, %v600
  %609 = vrot.lane.b32.xlu0 %v607, 32
  %v610 = vpop.permute.xlu0 %609
  %v612 = vsel %vm188, %v610, 0
  %614 = vmatprep.subr.bf16.mxu0 0
  %615 = vmatpush1.bf16.msra.mxu0 %v184
  %616 = vmatprep.subr.bf16.mxu0 0
  %617 = vmatpush1.bf16.msra.mxu0 %v185
  %618 = vmatprep.subr.bf16.mxu0 0
  %619 = vmatpush1.bf16.msra.mxu0 0
  %620 = vmatprep.subr.bf16.mxu0 0
  %621 = vmatpush1.bf16.msra.mxu0 0
  %622 = vmatprep.subr.bf16.mxu0 0
  %623 = vmatpush1.bf16.msra.mxu0 0
  %624 = vmatprep.subr.bf16.mxu0 0
  %625 = vmatpush1.bf16.msra.mxu0 0
  %626 = vmatprep.subr.bf16.mxu0 0
  %627 = vmatpush1.bf16.msra.mxu0 0
  %628 = vmatprep.subr.bf16.mxu0 0
  %629 = vmatpush1.bf16.msra.mxu0 0
  %630 = vmatprep.subr.bf16.mxu0 0
  %631 = vmatpush1.bf16.msra.mxu0 0
  %632 = vmatprep.subr.bf16.mxu0 0
  %633 = vmatpush1.bf16.msra.mxu0 0
  %634 = vmatprep.subr.bf16.mxu0 0
  %635 = vmatpush1.bf16.msra.mxu0 0
  %636 = vmatprep.subr.bf16.mxu0 0
  %637 = vmatpush1.bf16.msra.mxu0 0
  %638 = vmatprep.subr.bf16.mxu0 0
  %639 = vmatpush1.bf16.msra.mxu0 0
  %640 = vmatprep.subr.bf16.mxu0 0
  %641 = vmatpush1.bf16.msra.mxu0 0
  %642 = vmatprep.subr.bf16.mxu0 0
  %643 = vmatpush1.bf16.msra.mxu0 0
  %644 = vmatprep.subr.bf16.mxu0 0
  %645 = vmatpush1.bf16.msra.mxu0 0
  %646 = vmatprep.mubr.bf16.mxu0 0
  %647 = vmatmul.mubr.bf16.gmra.mrb[0].mxu0 %v612
  %v648 = vpop.f32.mrb[0].mxu0
  %v649 = vadd.f32 %v163, %v648
  %v650 = vpop.f32.mrb[0].mxu0
  %v651 = vpop.f32.mrb[0].mxu0
  %v652 = vpop.f32.mrb[0].mxu0
  %653 = vdwg.mxu0
  %s654 = scalar_lea.vmem [#allocation2], 16
  %v655 = vld [vmem:[%s654] sm:$0xff]
  %656 = vmatprep.subr.bf16.mxu0 0
  %657 = vmatpush1.bf16.msra.mxu0 %v242
  %658 = vmatprep.subr.bf16.mxu0 0
  %659 = vmatpush1.bf16.msra.mxu0 %v243
  %660 = vmatprep.subr.bf16.mxu0 0
  %661 = vmatpush1.bf16.msra.mxu0 0
  %662 = vmatprep.subr.bf16.mxu0 0
  %663 = vmatpush1.bf16.msra.mxu0 0
  %664 = vmatprep.subr.bf16.mxu0 0
  %665 = vmatpush1.bf16.msra.mxu0 0
  %666 = vmatprep.subr.bf16.mxu0 0
  %667 = vmatpush1.bf16.msra.mxu0 0
  %668 = vmatprep.subr.bf16.mxu0 0
  %669 = vmatpush1.bf16.msra.mxu0 0
  %670 = vmatprep.subr.bf16.mxu0 0
  %671 = vmatpush1.bf16.msra.mxu0 0
  %672 = vmatprep.subr.bf16.mxu0 0
  %673 = vmatpush1.bf16.msra.mxu0 0
  %674 = vmatprep.subr.bf16.mxu0 0
  %675 = vmatpush1.bf16.msra.mxu0 0
  %676 = vmatprep.subr.bf16.mxu0 0
  %677 = vmatpush1.bf16.msra.mxu0 0
  %678 = vmatprep.subr.bf16.mxu0 0
  %679 = vmatpush1.bf16.msra.mxu0 0
  %680 = vmatprep.subr.bf16.mxu0 0
  %681 = vmatpush1.bf16.msra.mxu0 0
  %682 = vmatprep.subr.bf16.mxu0 0
  %683 = vmatpush1.bf16.msra.mxu0 0
  %684 = vmatprep.subr.bf16.mxu0 0
  %685 = vmatpush1.bf16.msra.mxu0 0
  %686 = vmatprep.subr.bf16.mxu0 0
  %687 = vmatpush1.bf16.msra.mxu0 0
  %688 = vmatprep.mubr.bf16.mxu0 0
  %689 = vmatmul.mubr.bf16.gmra.mrb[0].mxu0 %v533
  %v690 = vpop.f32.mrb[0].mxu0
  %v691 = vadd.f32 0.0, %v690
  %v692 = vpop.f32.mrb[0].mxu0
  %v693 = vpop.f32.mrb[0].mxu0
  %v694 = vpop.f32.mrb[0].mxu0
  %695 = vdwg.mxu0
  %v696 = vadd.f32 %v655, %v691
  %v697 = vxor.u32 %v696, 2147483648
  %v698 = vmul.f32 %v697, 1.442695
  %v699 = vpow.pop %v698
  %v700 = vadd.f32 %v699, 1.0
  %v701 = vrcp.pop %v700
  %v702 = vmul.f32 1.0, %v701
  %v703 = vmul.f32 %v702, 2.0
  %v704 = vsub.f32 %v703, 1.0
  %v705 = vmul.f32 %v702, %v521
  %707 = vrot.lane.b32.xlu0 %v704, 64
  %v708 = vpop.permute.xlu0 %707
  %v710 = vmul.f32 %v702, %v708
  %712 = vrot.lane.b32.xlu0 %v710, 32
  %v713 = vpop.permute.xlu0 %712
  %v715 = vadd.f32 %v705, %v713
  %v716 = vtanh.pop %v715
  %718 = vrot.lane.b32.xlu0 %v716, 64
  %v719 = vpop.permute.xlu0 %718
  %v721 = vmul.f32 %v702, %v719
  %v722 = vpack.c.bf16 %v721, %v721
  %724 = vrot.lane.b32.xlu0 %v722, 32
  %v725 = vpop.permute.xlu0 %724
  %v727 = vsel %vm188, %v725, 0
  %729 = vmatprep.subr.bf16.mxu0 0
  %730 = vmatpush1.bf16.msra.mxu0 %v331
  %731 = vmatprep.subr.bf16.mxu0 0
  %732 = vmatpush1.bf16.msra.mxu0 %v332
  %733 = vmatprep.subr.bf16.mxu0 0
  %734 = vmatpush1.bf16.msra.mxu0 0
  %735 = vmatprep.subr.bf16.mxu0 0
  %736 = vmatpush1.bf16.msra.mxu0 0
  %737 = vmatprep.subr.bf16.mxu0 0
  %738 = vmatpush1.bf16.msra.mxu0 0
  %739 = vmatprep.subr.bf16.mxu0 0
  %740 = vmatpush1.bf16.msra.mxu0 0
  %741 = vmatprep.subr.bf16.mxu0 0
  %742 = vmatpush1.bf16.msra.mxu0 0
  %743 = vmatprep.subr.bf16.mxu0 0
  %744 = vmatpush1.bf16.msra.mxu0 0
  %745 = vmatprep.subr.bf16.mxu0 0
  %746 = vmatpush1.bf16.msra.mxu0 0
  %747 = vmatprep.subr.bf16.mxu0 0
  %748 = vmatpush1.bf16.msra.mxu0 0
  %749 = vmatprep.subr.bf16.mxu0 0
  %750 = vmatpush1.bf16.msra.mxu0 0
  %751 = vmatprep.subr.bf16.mxu0 0
  %752 = vmatpush1.bf16.msra.mxu0 0
  %753 = vmatprep.subr.bf16.mxu0 0
  %754 = vmatpush1.bf16.msra.mxu0 0
  %755 = vmatprep.subr.bf16.mxu0 0
  %756 = vmatpush1.bf16.msra.mxu0 0
  %757 = vmatprep.subr.bf16.mxu0 0
  %758 = vmatpush1.bf16.msra.mxu0 0
  %759 = vmatprep.subr.bf16.mxu0 0
  %760 = vmatpush1.bf16.msra.mxu0 0
  %761 = vmatprep.mubr.bf16.mxu0 0
  %762 = vmatmul.mubr.bf16.gmra.mrb[0].mxu0 %v727
  %v763 = vpop.f32.mrb[0].mxu0
  %v764 = vadd.f32 0.0, %v763
  %v765 = vpop.f32.mrb[0].mxu0
  %v766 = vpop.f32.mrb[0].mxu0
  %v767 = vpop.f32.mrb[0].mxu0
  %768 = vdwg.mxu0
  %v769 = vadd.f32 %v649, %v764
  %v770 = vxor.u32 %v769, 2147483648
  %v771 = vmul.f32 %v770, 1.442695
  %v772 = vpow.pop %v771
  %v773 = vadd.f32 %v772, 1.0
  %v774 = vrcp.pop %v773
  %v775 = vmul.f32 1.0, %v774
  %v776 = vmul.f32 %v775, 2.0
  %v777 = vsub.f32 %v776, 1.0
  %v778 = vmul.f32 %v775, %v594
  %780 = vrot.lane.b32.xlu0 %v777, 64
  %v781 = vpop.permute.xlu0 %780
  %v783 = vmul.f32 %v775, %v781
  %785 = vrot.lane.b32.xlu0 %v783, 32
  %v786 = vpop.permute.xlu0 %785
  %v788 = vadd.f32 %v778, %v786
  %v789 = vtanh.pop %v788
  %791 = vrot.lane.b32.xlu0 %v789, 64
  %v792 = vpop.permute.xlu0 %791
  %v794 = vmul.f32 %v775, %v792
  %796 = vrot.lane.b32.xlu0 %v794, 32
  %v797 = vpop.permute.xlu0 %796
  %s799 = scalar_lea.vmem [#allocation3], 16
  %800 = vst.msk [vmem:[%s799] sm:$0xff] %vm188, %v797
  %v801 = vpack.c.bf16 %v794, %v794
  %803 = vrot.lane.b32.xlu0 %v801, 32
  %v804 = vpop.permute.xlu0 %803
  %v806 = vsel %vm188, %v804, 0
  %808 = vmatprep.subr.bf16.mxu0 0
  %809 = vmatpush1.bf16.msra.mxu0 %v184
  %810 = vmatprep.subr.bf16.mxu0 0
  %811 = vmatpush1.bf16.msra.mxu0 %v185
  %812 = vmatprep.subr.bf16.mxu0 0
  %813 = vmatpush1.bf16.msra.mxu0 0
  %814 = vmatprep.subr.bf16.mxu0 0
  %815 = vmatpush1.bf16.msra.mxu0 0
  %816 = vmatprep.subr.bf16.mxu0 0
  %817 = vmatpush1.bf16.msra.mxu0 0
  %818 = vmatprep.subr.bf16.mxu0 0
  %819 = vmatpush1.bf16.msra.mxu0 0
  %820 = vmatprep.subr.bf16.mxu0 0
  %821 = vmatpush1.bf16.msra.mxu0 0
  %822 = vmatprep.subr.bf16.mxu0 0
  %823 = vmatpush1.bf16.msra.mxu0 0
  %824 = vmatprep.subr.bf16.mxu0 0
  %825 = vmatpush1.bf16.msra.mxu0 0
  %826 = vmatprep.subr.bf16.mxu0 0
  %827 = vmatpush1.bf16.msra.mxu0 0
  %828 = vmatprep.subr.bf16.mxu0 0
  %829 = vmatpush1.bf16.msra.mxu0 0
  %830 = vmatprep.subr.bf16.mxu0 0
  %831 = vmatpush1.bf16.msra.mxu0 0
  %832 = vmatprep.subr.bf16.mxu0 0
  %833 = vmatpush1.bf16.msra.mxu0 0
  %834 = vmatprep.subr.bf16.mxu0 0
  %835 = vmatpush1.bf16.msra.mxu0 0
  %836 = vmatprep.subr.bf16.mxu0 0
  %837 = vmatpush1.bf16.msra.mxu0 0
  %838 = vmatprep.subr.bf16.mxu0 0
  %839 = vmatpush1.bf16.msra.mxu0 0
  %840 = vmatprep.mubr.bf16.mxu0 0
  %841 = vmatmul.mubr.bf16.gmra.mrb[0].mxu0 %v806
  %v842 = vpop.f32.mrb[0].mxu0
  %v843 = vadd.f32 %v163, %v842
  %v844 = vpop.f32.mrb[0].mxu0
  %v845 = vpop.f32.mrb[0].mxu0
  %v846 = vpop.f32.mrb[0].mxu0
  %847 = vdwg.mxu0
  %s848 = scalar_lea.vmem [#allocation2], 24
  %v849 = vld [vmem:[%s848] sm:$0xff]
  %850 = vmatprep.subr.bf16.mxu0 0
  %851 = vmatpush1.bf16.msra.mxu0 %v242
  %852 = vmatprep.subr.bf16.mxu0 0
  %853 = vmatpush1.bf16.msra.mxu0 %v243
  %854 = vmatprep.subr.bf16.mxu0 0
  %855 = vmatpush1.bf16.msra.mxu0 0
  %856 = vmatprep.subr.bf16.mxu0 0
  %857 = vmatpush1.bf16.msra.mxu0 0
  %858 = vmatprep.subr.bf16.mxu0 0
  %859 = vmatpush1.bf16.msra.mxu0 0
  %860 = vmatprep.subr.bf16.mxu0 0
  %861 = vmatpush1.bf16.msra.mxu0 0
  %862 = vmatprep.subr.bf16.mxu0 0
  %863 = vmatpush1.bf16.msra.mxu0 0
  %864 = vmatprep.subr.bf16.mxu0 0
  %865 = vmatpush1.bf16.msra.mxu0 0
  %866 = vmatprep.subr.bf16.mxu0 0
  %867 = vmatpush1.bf16.msra.mxu0 0
  %868 = vmatprep.subr.bf16.mxu0 0
  %869 = vmatpush1.bf16.msra.mxu0 0
  %870 = vmatprep.subr.bf16.mxu0 0
  %871 = vmatpush1.bf16.msra.mxu0 0
  %872 = vmatprep.subr.bf16.mxu0 0
  %873 = vmatpush1.bf16.msra.mxu0 0
  %874 = vmatprep.subr.bf16.mxu0 0
  %875 = vmatpush1.bf16.msra.mxu0 0
  %876 = vmatprep.subr.bf16.mxu0 0
  %877 = vmatpush1.bf16.msra.mxu0 0
  %878 = vmatprep.subr.bf16.mxu0 0
  %879 = vmatpush1.bf16.msra.mxu0 0
  %880 = vmatprep.subr.bf16.mxu0 0
  %881 = vmatpush1.bf16.msra.mxu0 0
  %882 = vmatprep.mubr.bf16.mxu0 0
  %883 = vmatmul.mubr.bf16.gmra.mrb[0].mxu0 %v727
  %v884 = vpop.f32.mrb[0].mxu0
  %v885 = vadd.f32 0.0, %v884
  %v886 = vpop.f32.mrb[0].mxu0
  %v887 = vpop.f32.mrb[0].mxu0
  %v888 = vpop.f32.mrb[0].mxu0
  %889 = vdwg.mxu0
  %v890 = vadd.f32 %v849, %v885
  %v891 = vxor.u32 %v890, 2147483648
  %v892 = vmul.f32 %v891, 1.442695
  %v893 = vpow.pop %v892
  %v894 = vadd.f32 %v893, 1.0
  %v895 = vrcp.pop %v894
  %v896 = vmul.f32 1.0, %v895
  %v897 = vmul.f32 %v896, 2.0
  %v898 = vsub.f32 %v897, 1.0
  %v899 = vmul.f32 %v896, %v715
  %901 = vrot.lane.b32.xlu0 %v898, 64
  %v902 = vpop.permute.xlu0 %901
  %v904 = vmul.f32 %v896, %v902
  %906 = vrot.lane.b32.xlu0 %v904, 32
  %v907 = vpop.permute.xlu0 %906
  %v909 = vadd.f32 %v899, %v907
  %v910 = vtanh.pop %v909
  %912 = vrot.lane.b32.xlu0 %v910, 64
  %v913 = vpop.permute.xlu0 %912
  %v915 = vmul.f32 %v896, %v913
  %v916 = vpack.c.bf16 %v915, %v915
  %918 = vrot.lane.b32.xlu0 %v916, 32
  %v919 = vpop.permute.xlu0 %918
  %v921 = vsel %vm188, %v919, 0
  %923 = vmatprep.subr.bf16.mxu0 0
  %924 = vmatpush1.bf16.msra.mxu0 %v331
  %925 = vmatprep.subr.bf16.mxu0 0
  %926 = vmatpush1.bf16.msra.mxu0 %v332
  %927 = vmatprep.subr.bf16.mxu0 0
  %928 = vmatpush1.bf16.msra.mxu0 0
  %929 = vmatprep.subr.bf16.mxu0 0
  %930 = vmatpush1.bf16.msra.mxu0 0
  %931 = vmatprep.subr.bf16.mxu0 0
  %932 = vmatpush1.bf16.msra.mxu0 0
  %933 = vmatprep.subr.bf16.mxu0 0
  %934 = vmatpush1.bf16.msra.mxu0 0
  %935 = vmatprep.subr.bf16.mxu0 0
  %936 = vmatpush1.bf16.msra.mxu0 0
  %937 = vmatprep.subr.bf16.mxu0 0
  %938 = vmatpush1.bf16.msra.mxu0 0
  %939 = vmatprep.subr.bf16.mxu0 0
  %940 = vmatpush1.bf16.msra.mxu0 0
  %941 = vmatprep.subr.bf16.mxu0 0
  %942 = vmatpush1.bf16.msra.mxu0 0
  %943 = vmatprep.subr.bf16.mxu0 0
  %944 = vmatpush1.bf16.msra.mxu0 0
  %945 = vmatprep.subr.bf16.mxu0 0
  %946 = vmatpush1.bf16.msra.mxu0 0
  %947 = vmatprep.subr.bf16.mxu0 0
  %948 = vmatpush1.bf16.msra.mxu0 0
  %949 = vmatprep.subr.bf16.mxu0 0
  %950 = vmatpush1.bf16.msra.mxu0 0
  %951 = vmatprep.subr.bf16.mxu0 0
  %952 = vmatpush1.bf16.msra.mxu0 0
  %953 = vmatprep.subr.bf16.mxu0 0
  %954 = vmatpush1.bf16.msra.mxu0 0
  %955 = vmatprep.mubr.bf16.mxu0 0
  %956 = vmatmul.mubr.bf16.gmra.mrb[0].mxu0 %v921
  %v957 = vpop.f32.mrb[0].mxu0
  %v958 = vadd.f32 0.0, %v957
  %v959 = vpop.f32.mrb[0].mxu0
  %v960 = vpop.f32.mrb[0].mxu0
  %v961 = vpop.f32.mrb[0].mxu0
  %962 = vdwg.mxu0
  %v963 = vadd.f32 %v843, %v958
  %v964 = vxor.u32 %v963, 2147483648
  %v965 = vmul.f32 %v964, 1.442695
  %v966 = vpow.pop %v965
  %v967 = vadd.f32 %v966, 1.0
  %v968 = vrcp.pop %v967
  %v969 = vmul.f32 1.0, %v968
  %v970 = vmul.f32 %v969, 2.0
  %v971 = vsub.f32 %v970, 1.0
  %v972 = vmul.f32 %v969, %v788
  %974 = vrot.lane.b32.xlu0 %v971, 64
  %v975 = vpop.permute.xlu0 %974
  %v977 = vmul.f32 %v969, %v975
  %979 = vrot.lane.b32.xlu0 %v977, 32
  %v980 = vpop.permute.xlu0 %979
  %v982 = vadd.f32 %v972, %v980
  %v983 = vtanh.pop %v982
  %985 = vrot.lane.b32.xlu0 %v983, 64
  %v986 = vpop.permute.xlu0 %985
  %v988 = vmul.f32 %v969, %v986
  %990 = vrot.lane.b32.xlu0 %v988, 32
  %v991 = vpop.permute.xlu0 %990
  %s993 = scalar_lea.vmem [#allocation3], 24
  %994 = vst.msk [vmem:[%s993] sm:$0xff] %vm188, %v991
  %v995 = vpack.c.bf16 %v988, %v988
  %997 = vrot.lane.b32.xlu0 %v995, 32
  %v998 = vpop.permute.xlu0 %997
  %v1000 = vsel %vm188, %v998, 0
  %1002 = vmatprep.subr.bf16.mxu0 0
  %1003 = vmatpush1.bf16.msra.mxu0 %v184
  %1004 = vmatprep.subr.bf16.mxu0 0
  %1005 = vmatpush1.bf16.msra.mxu0 %v185
  %1006 = vmatprep.subr.bf16.mxu0 0
  %1007 = vmatpush1.bf16.msra.mxu0 0
  %1008 = vmatprep.subr.bf16.mxu0 0
  %1009 = vmatpush1.bf16.msra.mxu0 0
  %1010 = vmatprep.subr.bf16.mxu0 0
  %1011 = vmatpush1.bf16.msra.mxu0 0
  %1012 = vmatprep.subr.bf16.mxu0 0
  %1013 = vmatpush1.bf16.msra.mxu0 0
  %1014 = vmatprep.subr.bf16.mxu0 0
  %1015 = vmatpush1.bf16.msra.mxu0 0
  %1016 = vmatprep.subr.bf16.mxu0 0
  %1017 = vmatpush1.bf16.msra.mxu0 0
  %1018 = vmatprep.subr.bf16.mxu0 0
  %1019 = vmatpush1.bf16.msra.mxu0 0
  %1020 = vmatprep.subr.bf16.mxu0 0
  %1021 = vmatpush1.bf16.msra.mxu0 0
  %1022 = vmatprep.subr.bf16.mxu0 0
  %1023 = vmatpush1.bf16.msra.mxu0 0
  %1024 = vmatprep.subr.bf16.mxu0 0
  %1025 = vmatpush1.bf16.msra.mxu0 0
  %1026 = vmatprep.subr.bf16.mxu0 0
  %1027 = vmatpush1.bf16.msra.mxu0 0
  %1028 = vmatprep.subr.bf16.mxu0 0
  %1029 = vmatpush1.bf16.msra.mxu0 0
  %1030 = vmatprep.subr.bf16.mxu0 0
  %1031 = vmatpush1.bf16.msra.mxu0 0
  %1032 = vmatprep.subr.bf16.mxu0 0
  %1033 = vmatpush1.bf16.msra.mxu0 0
  %1034 = vmatprep.mubr.bf16.mxu0 0
  %1035 = vmatmul.mubr.bf16.gmra.mrb[0].mxu0 %v1000
  %v1036 = vpop.f32.mrb[0].mxu0
  %v1037 = vadd.f32 %v163, %v1036
  %v1038 = vpop.f32.mrb[0].mxu0
  %v1039 = vpop.f32.mrb[0].mxu0
  %v1040 = vpop.f32.mrb[0].mxu0
  %1041 = vdwg.mxu0
  %s1042 = scalar_lea.vmem [#allocation2], 32
  %v1043 = vld [vmem:[%s1042] sm:$0xff]
  %1044 = vmatprep.subr.bf16.mxu0 0
  %1045 = vmatpush1.bf16.msra.mxu0 %v242
  %1046 = vmatprep.subr.bf16.mxu0 0
  %1047 = vmatpush1.bf16.msra.mxu0 %v243
  %1048 = vmatprep.subr.bf16.mxu0 0
  %1049 = vmatpush1.bf16.msra.mxu0 0
  %1050 = vmatprep.subr.bf16.mxu0 0
  %1051 = vmatpush1.bf16.msra.mxu0 0
  %1052 = vmatprep.subr.bf16.mxu0 0
  %1053 = vmatpush1.bf16.msra.mxu0 0
  %1054 = vmatprep.subr.bf16.mxu0 0
  %1055 = vmatpush1.bf16.msra.mxu0 0
  %1056 = vmatprep.subr.bf16.mxu0 0
  %1057 = vmatpush1.bf16.msra.mxu0 0
  %1058 = vmatprep.subr.bf16.mxu0 0
  %1059 = vmatpush1.bf16.msra.mxu0 0
  %1060 = vmatprep.subr.bf16.mxu0 0
  %1061 = vmatpush1.bf16.msra.mxu0 0
  %1062 = vmatprep.subr.bf16.mxu0 0
  %1063 = vmatpush1.bf16.msra.mxu0 0
  %1064 = vmatprep.subr.bf16.mxu0 0
  %1065 = vmatpush1.bf16.msra.mxu0 0
  %1066 = vmatprep.subr.bf16.mxu0 0
  %1067 = vmatpush1.bf16.msra.mxu0 0
  %1068 = vmatprep.subr.bf16.mxu0 0
  %1069 = vmatpush1.bf16.msra.mxu0 0
  %1070 = vmatprep.subr.bf16.mxu0 0
  %1071 = vmatpush1.bf16.msra.mxu0 0
  %1072 = vmatprep.subr.bf16.mxu0 0
  %1073 = vmatpush1.bf16.msra.mxu0 0
  %1074 = vmatprep.subr.bf16.mxu0 0
  %1075 = vmatpush1.bf16.msra.mxu0 0
  %1076 = vmatprep.mubr.bf16.mxu0 0
  %1077 = vmatmul.mubr.bf16.gmra.mrb[0].mxu0 %v921
  %v1078 = vpop.f32.mrb[0].mxu0
  %v1079 = vadd.f32 0.0, %v1078
  %v1080 = vpop.f32.mrb[0].mxu0
  %v1081 = vpop.f32.mrb[0].mxu0
  %v1082 = vpop.f32.mrb[0].mxu0
  %1083 = vdwg.mxu0
  %v1084 = vadd.f32 %v1043, %v1079
  %v1085 = vxor.u32 %v1084, 2147483648
  %v1086 = vmul.f32 %v1085, 1.442695
  %v1087 = vpow.pop %v1086
  %v1088 = vadd.f32 %v1087, 1.0
  %v1089 = vrcp.pop %v1088
  %v1090 = vmul.f32 1.0, %v1089
  %v1091 = vmul.f32 %v1090, 2.0
  %v1092 = vsub.f32 %v1091, 1.0
  %v1093 = vmul.f32 %v1090, %v909
  %1095 = vrot.lane.b32.xlu0 %v1092, 64
  %v1096 = vpop.permute.xlu0 %1095
  %v1098 = vmul.f32 %v1090, %v1096
  %1100 = vrot.lane.b32.xlu0 %v1098, 32
  %v1101 = vpop.permute.xlu0 %1100
  %v1103 = vadd.f32 %v1093, %v1101
  %v1104 = vtanh.pop %v1103
  %1106 = vrot.lane.b32.xlu0 %v1104, 64
  %v1107 = vpop.permute.xlu0 %1106
  %v1109 = vmul.f32 %v1090, %v1107
  %v1110 = vpack.c.bf16 %v1109, %v1109
  %1112 = vrot.lane.b32.xlu0 %v1110, 32
  %v1113 = vpop.permute.xlu0 %1112
  %v1115 = vsel %vm188, %v1113, 0
  %1117 = vmatprep.subr.bf16.mxu0 0
  %1118 = vmatpush1.bf16.msra.mxu0 %v331
  %1119 = vmatprep.subr.bf16.mxu0 0
  %1120 = vmatpush1.bf16.msra.mxu0 %v332
  %1121 = vmatprep.subr.bf16.mxu0 0
  %1122 = vmatpush1.bf16.msra.mxu0 0
  %1123 = vmatprep.subr.bf16.mxu0 0
  %1124 = vmatpush1.bf16.msra.mxu0 0
  %1125 = vmatprep.subr.bf16.mxu0 0
  %1126 = vmatpush1.bf16.msra.mxu0 0
  %1127 = vmatprep.subr.bf16.mxu0 0
  %1128 = vmatpush1.bf16.msra.mxu0 0
  %1129 = vmatprep.subr.bf16.mxu0 0
  %1130 = vmatpush1.bf16.msra.mxu0 0
  %1131 = vmatprep.subr.bf16.mxu0 0
  %1132 = vmatpush1.bf16.msra.mxu0 0
  %1133 = vmatprep.subr.bf16.mxu0 0
  %1134 = vmatpush1.bf16.msra.mxu0 0
  %1135 = vmatprep.subr.bf16.mxu0 0
  %1136 = vmatpush1.bf16.msra.mxu0 0
  %1137 = vmatprep.subr.bf16.mxu0 0
  %1138 = vmatpush1.bf16.msra.mxu0 0
  %1139 = vmatprep.subr.bf16.mxu0 0
  %1140 = vmatpush1.bf16.msra.mxu0 0
  %1141 = vmatprep.subr.bf16.mxu0 0
  %1142 = vmatpush1.bf16.msra.mxu0 0
  %1143 = vmatprep.subr.bf16.mxu0 0
  %1144 = vmatpush1.bf16.msra.mxu0 0
  %1145 = vmatprep.subr.bf16.mxu0 0
  %1146 = vmatpush1.bf16.msra.mxu0 0
  %1147 = vmatprep.subr.bf16.mxu0 0
  %1148 = vmatpush1.bf16.msra.mxu0 0
  %1149 = vmatprep.mubr.bf16.mxu0 0
  %1150 = vmatmul.mubr.bf16.gmra.mrb[0].mxu0 %v1115
  %v1151 = vpop.f32.mrb[0].mxu0
  %v1152 = vadd.f32 0.0, %v1151
  %v1153 = vpop.f32.mrb[0].mxu0
  %v1154 = vpop.f32.mrb[0].mxu0
  %v1155 = vpop.f32.mrb[0].mxu0
  %1156 = vdwg.mxu0
  %v1157 = vadd.f32 %v1037, %v1152
  %v1158 = vxor.u32 %v1157, 2147483648
  %v1159 = vmul.f32 %v1158, 1.442695
  %v1160 = vpow.pop %v1159
  %v1161 = vadd.f32 %v1160, 1.0
  %v1162 = vrcp.pop %v1161
  %v1163 = vmul.f32 1.0, %v1162
  %v1164 = vmul.f32 %v1163, 2.0
  %v1165 = vsub.f32 %v1164, 1.0
  %v1166 = vmul.f32 %v1163, %v982
  %1168 = vrot.lane.b32.xlu0 %v1165, 64
  %v1169 = vpop.permute.xlu0 %1168
  %v1171 = vmul.f32 %v1163, %v1169
  %1173 = vrot.lane.b32.xlu0 %v1171, 32
  %v1174 = vpop.permute.xlu0 %1173
  %v1176 = vadd.f32 %v1166, %v1174
  %v1177 = vtanh.pop %v1176
  %1179 = vrot.lane.b32.xlu0 %v1177, 64
  %v1180 = vpop.permute.xlu0 %1179
  %v1182 = vmul.f32 %v1163, %v1180
  %1184 = vrot.lane.b32.xlu0 %v1182, 32
  %v1185 = vpop.permute.xlu0 %1184
  %s1187 = scalar_lea.vmem [#allocation3], 32
  %1188 = vst.msk [vmem:[%s1187] sm:$0xff] %vm188, %v1185
  %v1189 = vpack.c.bf16 %v1182, %v1182
  %1191 = vrot.lane.b32.xlu0 %v1189, 32
  %v1192 = vpop.permute.xlu0 %1191
  %v1194 = vsel %vm188, %v1192, 0
  %1196 = vmatprep.subr.bf16.mxu0 0
  %1197 = vmatpush1.bf16.msra.mxu0 %v184
  %1198 = vmatprep.subr.bf16.mxu0 0
  %1199 = vmatpush1.bf16.msra.mxu0 %v185
  %1200 = vmatprep.subr.bf16.mxu0 0
  %1201 = vmatpush1.bf16.msra.mxu0 0
  %1202 = vmatprep.subr.bf16.mxu0 0
  %1203 = vmatpush1.bf16.msra.mxu0 0
  %1204 = vmatprep.subr.bf16.mxu0 0
  %1205 = vmatpush1.bf16.msra.mxu0 0
  %1206 = vmatprep.subr.bf16.mxu0 0
  %1207 = vmatpush1.bf16.msra.mxu0 0
  %1208 = vmatprep.subr.bf16.mxu0 0
  %1209 = vmatpush1.bf16.msra.mxu0 0
  %1210 = vmatprep.subr.bf16.mxu0 0
  %1211 = vmatpush1.bf16.msra.mxu0 0
  %1212 = vmatprep.subr.bf16.mxu0 0
  %1213 = vmatpush1.bf16.msra.mxu0 0
  %1214 = vmatprep.subr.bf16.mxu0 0
  %1215 = vmatpush1.bf16.msra.mxu0 0
  %1216 = vmatprep.subr.bf16.mxu0 0
  %1217 = vmatpush1.bf16.msra.mxu0 0
  %1218 = vmatprep.subr.bf16.mxu0 0
  %1219 = vmatpush1.bf16.msra.mxu0 0
  %1220 = vmatprep.subr.bf16.mxu0 0
  %1221 = vmatpush1.bf16.msra.mxu0 0
  %1222 = vmatprep.subr.bf16.mxu0 0
  %1223 = vmatpush1.bf16.msra.mxu0 0
  %1224 = vmatprep.subr.bf16.mxu0 0
  %1225 = vmatpush1.bf16.msra.mxu0 0
  %1226 = vmatprep.subr.bf16.mxu0 0
  %1227 = vmatpush1.bf16.msra.mxu0 0
  %1228 = vmatprep.mubr.bf16.mxu0 0
  %1229 = vmatmul.mubr.bf16.gmra.mrb[0].mxu0 %v1194
  %v1230 = vpop.f32.mrb[0].mxu0
  %v1231 = vadd.f32 %v163, %v1230
  %v1232 = vpop.f32.mrb[0].mxu0
  %v1233 = vpop.f32.mrb[0].mxu0
  %v1234 = vpop.f32.mrb[0].mxu0
  %1235 = vdwg.mxu0
  %s1236 = scalar_lea.vmem [#allocation2], 40
  %v1237 = vld [vmem:[%s1236] sm:$0xff]
  %1238 = vmatprep.subr.bf16.mxu0 0
  %1239 = vmatpush1.bf16.msra.mxu0 %v242
  %1240 = vmatprep.subr.bf16.mxu0 0
  %1241 = vmatpush1.bf16.msra.mxu0 %v243
  %1242 = vmatprep.subr.bf16.mxu0 0
  %1243 = vmatpush1.bf16.msra.mxu0 0
  %1244 = vmatprep.subr.bf16.mxu0 0
  %1245 = vmatpush1.bf16.msra.mxu0 0
  %1246 = vmatprep.subr.bf16.mxu0 0
  %1247 = vmatpush1.bf16.msra.mxu0 0
  %1248 = vmatprep.subr.bf16.mxu0 0
  %1249 = vmatpush1.bf16.msra.mxu0 0
  %1250 = vmatprep.subr.bf16.mxu0 0
  %1251 = vmatpush1.bf16.msra.mxu0 0
  %1252 = vmatprep.subr.bf16.mxu0 0
  %1253 = vmatpush1.bf16.msra.mxu0 0
  %1254 = vmatprep.subr.bf16.mxu0 0
  %1255 = vmatpush1.bf16.msra.mxu0 0
  %1256 = vmatprep.subr.bf16.mxu0 0
  %1257 = vmatpush1.bf16.msra.mxu0 0
  %1258 = vmatprep.subr.bf16.mxu0 0
  %1259 = vmatpush1.bf16.msra.mxu0 0
  %1260 = vmatprep.subr.bf16.mxu0 0
  %1261 = vmatpush1.bf16.msra.mxu0 0
  %1262 = vmatprep.subr.bf16.mxu0 0
  %1263 = vmatpush1.bf16.msra.mxu0 0
  %1264 = vmatprep.subr.bf16.mxu0 0
  %1265 = vmatpush1.bf16.msra.mxu0 0
  %1266 = vmatprep.subr.bf16.mxu0 0
  %1267 = vmatpush1.bf16.msra.mxu0 0
  %1268 = vmatprep.subr.bf16.mxu0 0
  %1269 = vmatpush1.bf16.msra.mxu0 0
  %1270 = vmatprep.mubr.bf16.mxu0 0
  %1271 = vmatmul.mubr.bf16.gmra.mrb[0].mxu0 %v1115
  %v1272 = vpop.f32.mrb[0].mxu0
  %v1273 = vadd.f32 0.0, %v1272
  %v1274 = vpop.f32.mrb[0].mxu0
  %v1275 = vpop.f32.mrb[0].mxu0
  %v1276 = vpop.f32.mrb[0].mxu0
  %1277 = vdwg.mxu0
  %v1278 = vadd.f32 %v1237, %v1273
  %v1279 = vxor.u32 %v1278, 2147483648
  %v1280 = vmul.f32 %v1279, 1.442695
  %v1281 = vpow.pop %v1280
  %v1282 = vadd.f32 %v1281, 1.0
  %v1283 = vrcp.pop %v1282
  %v1284 = vmul.f32 1.0, %v1283
  %v1285 = vmul.f32 %v1284, 2.0
  %v1286 = vsub.f32 %v1285, 1.0
  %v1287 = vmul.f32 %v1284, %v1103
  %1289 = vrot.lane.b32.xlu0 %v1286, 64
  %v1290 = vpop.permute.xlu0 %1289
  %v1292 = vmul.f32 %v1284, %v1290
  %1294 = vrot.lane.b32.xlu0 %v1292, 32
  %v1295 = vpop.permute.xlu0 %1294
  %v1297 = vadd.f32 %v1287, %v1295
  %v1298 = vtanh.pop %v1297
  %1300 = vrot.lane.b32.xlu0 %v1298, 64
  %v1301 = vpop.permute.xlu0 %1300
  %v1303 = vmul.f32 %v1284, %v1301
  %v1304 = vpack.c.bf16 %v1303, %v1303
  %1306 = vrot.lane.b32.xlu0 %v1304, 32
  %v1307 = vpop.permute.xlu0 %1306
  %v1309 = vsel %vm188, %v1307, 0
  %1311 = vmatprep.subr.bf16.mxu0 0
  %1312 = vmatpush1.bf16.msra.mxu0 %v331
  %1313 = vmatprep.subr.bf16.mxu0 0
  %1314 = vmatpush1.bf16.msra.mxu0 %v332
  %1315 = vmatprep.subr.bf16.mxu0 0
  %1316 = vmatpush1.bf16.msra.mxu0 0
  %1317 = vmatprep.subr.bf16.mxu0 0
  %1318 = vmatpush1.bf16.msra.mxu0 0
  %1319 = vmatprep.subr.bf16.mxu0 0
  %1320 = vmatpush1.bf16.msra.mxu0 0
  %1321 = vmatprep.subr.bf16.mxu0 0
  %1322 = vmatpush1.bf16.msra.mxu0 0
  %1323 = vmatprep.subr.bf16.mxu0 0
  %1324 = vmatpush1.bf16.msra.mxu0 0
  %1325 = vmatprep.subr.bf16.mxu0 0
  %1326 = vmatpush1.bf16.msra.mxu0 0
  %1327 = vmatprep.subr.bf16.mxu0 0
  %1328 = vmatpush1.bf16.msra.mxu0 0
  %1329 = vmatprep.subr.bf16.mxu0 0
  %1330 = vmatpush1.bf16.msra.mxu0 0
  %1331 = vmatprep.subr.bf16.mxu0 0
  %1332 = vmatpush1.bf16.msra.mxu0 0
  %1333 = vmatprep.subr.bf16.mxu0 0
  %1334 = vmatpush1.bf16.msra.mxu0 0
  %1335 = vmatprep.subr.bf16.mxu0 0
  %1336 = vmatpush1.bf16.msra.mxu0 0
  %1337 = vmatprep.subr.bf16.mxu0 0
  %1338 = vmatpush1.bf16.msra.mxu0 0
  %1339 = vmatprep.subr.bf16.mxu0 0
  %1340 = vmatpush1.bf16.msra.mxu0 0
  %1341 = vmatprep.subr.bf16.mxu0 0
  %1342 = vmatpush1.bf16.msra.mxu0 0
  %1343 = vmatprep.mubr.bf16.mxu0 0
  %1344 = vmatmul.mubr.bf16.gmra.mrb[0].mxu0 %v1309
  %v1345 = vpop.f32.mrb[0].mxu0
  %v1346 = vadd.f32 0.0, %v1345
  %v1347 = vpop.f32.mrb[0].mxu0
  %v1348 = vpop.f32.mrb[0].mxu0
  %v1349 = vpop.f32.mrb[0].mxu0
  %1350 = vdwg.mxu0
  %v1351 = vadd.f32 %v1231, %v1346
  %v1352 = vxor.u32 %v1351, 2147483648
  %v1353 = vmul.f32 %v1352, 1.442695
  %v1354 = vpow.pop %v1353
  %v1355 = vadd.f32 %v1354, 1.0
  %v1356 = vrcp.pop %v1355
  %v1357 = vmul.f32 1.0, %v1356
  %v1358 = vmul.f32 %v1357, 2.0
  %v1359 = vsub.f32 %v1358, 1.0
  %v1360 = vmul.f32 %v1357, %v1176
  %1362 = vrot.lane.b32.xlu0 %v1359, 64
  %v1363 = vpop.permute.xlu0 %1362
  %v1365 = vmul.f32 %v1357, %v1363
  %1367 = vrot.lane.b32.xlu0 %v1365, 32
  %v1368 = vpop.permute.xlu0 %1367
  %v1370 = vadd.f32 %v1360, %v1368
  %v1371 = vtanh.pop %v1370
  %1373 = vrot.lane.b32.xlu0 %v1371, 64
  %v1374 = vpop.permute.xlu0 %1373
  %v1376 = vmul.f32 %v1357, %v1374
  %1378 = vrot.lane.b32.xlu0 %v1376, 32
  %v1379 = vpop.permute.xlu0 %1378
  %s1381 = scalar_lea.vmem [#allocation3], 40
  %1382 = vst.msk [vmem:[%s1381] sm:$0xff] %vm188, %v1379
  %v1383 = vpack.c.bf16 %v1376, %v1376
  %1385 = vrot.lane.b32.xlu0 %v1383, 32
  %v1386 = vpop.permute.xlu0 %1385
  %v1388 = vsel %vm188, %v1386, 0
  %1390 = vmatprep.subr.bf16.mxu0 0
  %1391 = vmatpush1.bf16.msra.mxu0 %v184
  %1392 = vmatprep.subr.bf16.mxu0 0
  %1393 = vmatpush1.bf16.msra.mxu0 %v185
  %1394 = vmatprep.subr.bf16.mxu0 0
  %1395 = vmatpush1.bf16.msra.mxu0 0
  %1396 = vmatprep.subr.bf16.mxu0 0
  %1397 = vmatpush1.bf16.msra.mxu0 0
  %1398 = vmatprep.subr.bf16.mxu0 0
  %1399 = vmatpush1.bf16.msra.mxu0 0
  %1400 = vmatprep.subr.bf16.mxu0 0
  %1401 = vmatpush1.bf16.msra.mxu0 0
  %1402 = vmatprep.subr.bf16.mxu0 0
  %1403 = vmatpush1.bf16.msra.mxu0 0
  %1404 = vmatprep.subr.bf16.mxu0 0
  %1405 = vmatpush1.bf16.msra.mxu0 0
  %1406 = vmatprep.subr.bf16.mxu0 0
  %1407 = vmatpush1.bf16.msra.mxu0 0
  %1408 = vmatprep.subr.bf16.mxu0 0
  %1409 = vmatpush1.bf16.msra.mxu0 0
  %1410 = vmatprep.subr.bf16.mxu0 0
  %1411 = vmatpush1.bf16.msra.mxu0 0
  %1412 = vmatprep.subr.bf16.mxu0 0
  %1413 = vmatpush1.bf16.msra.mxu0 0
  %1414 = vmatprep.subr.bf16.mxu0 0
  %1415 = vmatpush1.bf16.msra.mxu0 0
  %1416 = vmatprep.subr.bf16.mxu0 0
  %1417 = vmatpush1.bf16.msra.mxu0 0
  %1418 = vmatprep.subr.bf16.mxu0 0
  %1419 = vmatpush1.bf16.msra.mxu0 0
  %1420 = vmatprep.subr.bf16.mxu0 0
  %1421 = vmatpush1.bf16.msra.mxu0 0
  %1422 = vmatprep.mubr.bf16.mxu0 0
  %1423 = vmatmul.mubr.bf16.gmra.mrb[0].mxu0 %v1388
  %v1424 = vpop.f32.mrb[0].mxu0
  %v1425 = vadd.f32 %v163, %v1424
  %v1426 = vpop.f32.mrb[0].mxu0
  %v1427 = vpop.f32.mrb[0].mxu0
  %v1428 = vpop.f32.mrb[0].mxu0
  %1429 = vdwg.mxu0
  %s1430 = scalar_lea.vmem [#allocation2], 48
  %v1431 = vld [vmem:[%s1430] sm:$0xff]
  %1432 = vmatprep.subr.bf16.mxu0 0
  %1433 = vmatpush1.bf16.msra.mxu0 %v242
  %1434 = vmatprep.subr.bf16.mxu0 0
  %1435 = vmatpush1.bf16.msra.mxu0 %v243
  %1436 = vmatprep.subr.bf16.mxu0 0
  %1437 = vmatpush1.bf16.msra.mxu0 0
  %1438 = vmatprep.subr.bf16.mxu0 0
  %1439 = vmatpush1.bf16.msra.mxu0 0
  %1440 = vmatprep.subr.bf16.mxu0 0
  %1441 = vmatpush1.bf16.msra.mxu0 0
  %1442 = vmatprep.subr.bf16.mxu0 0
  %1443 = vmatpush1.bf16.msra.mxu0 0
  %1444 = vmatprep.subr.bf16.mxu0 0
  %1445 = vmatpush1.bf16.msra.mxu0 0
  %1446 = vmatprep.subr.bf16.mxu0 0
  %1447 = vmatpush1.bf16.msra.mxu0 0
  %1448 = vmatprep.subr.bf16.mxu0 0
  %1449 = vmatpush1.bf16.msra.mxu0 0
  %1450 = vmatprep.subr.bf16.mxu0 0
  %1451 = vmatpush1.bf16.msra.mxu0 0
  %1452 = vmatprep.subr.bf16.mxu0 0
  %1453 = vmatpush1.bf16.msra.mxu0 0
  %1454 = vmatprep.subr.bf16.mxu0 0
  %1455 = vmatpush1.bf16.msra.mxu0 0
  %1456 = vmatprep.subr.bf16.mxu0 0
  %1457 = vmatpush1.bf16.msra.mxu0 0
  %1458 = vmatprep.subr.bf16.mxu0 0
  %1459 = vmatpush1.bf16.msra.mxu0 0
  %1460 = vmatprep.subr.bf16.mxu0 0
  %1461 = vmatpush1.bf16.msra.mxu0 0
  %1462 = vmatprep.subr.bf16.mxu0 0
  %1463 = vmatpush1.bf16.msra.mxu0 0
  %1464 = vmatprep.mubr.bf16.mxu0 0
  %1465 = vmatmul.mubr.bf16.gmra.mrb[0].mxu0 %v1309
  %v1466 = vpop.f32.mrb[0].mxu0
  %v1467 = vadd.f32 0.0, %v1466
  %v1468 = vpop.f32.mrb[0].mxu0
  %v1469 = vpop.f32.mrb[0].mxu0
  %v1470 = vpop.f32.mrb[0].mxu0
  %1471 = vdwg.mxu0
  %v1472 = vadd.f32 %v1431, %v1467
  %v1473 = vxor.u32 %v1472, 2147483648
  %v1474 = vmul.f32 %v1473, 1.442695
  %v1475 = vpow.pop %v1474
  %v1476 = vadd.f32 %v1475, 1.0
  %v1477 = vrcp.pop %v1476
  %v1478 = vmul.f32 1.0, %v1477
  %v1479 = vmul.f32 %v1478, 2.0
  %v1480 = vsub.f32 %v1479, 1.0
  %v1481 = vmul.f32 %v1478, %v1297
  %1483 = vrot.lane.b32.xlu0 %v1480, 64
  %v1484 = vpop.permute.xlu0 %1483
  %v1486 = vmul.f32 %v1478, %v1484
  %1488 = vrot.lane.b32.xlu0 %v1486, 32
  %v1489 = vpop.permute.xlu0 %1488
  %v1491 = vadd.f32 %v1481, %v1489
  %v1492 = vtanh.pop %v1491
  %1494 = vrot.lane.b32.xlu0 %v1492, 64
  %v1495 = vpop.permute.xlu0 %1494
  %v1497 = vmul.f32 %v1478, %v1495
  %v1498 = vpack.c.bf16 %v1497, %v1497
  %1500 = vrot.lane.b32.xlu0 %v1498, 32
  %v1501 = vpop.permute.xlu0 %1500
  %v1503 = vsel %vm188, %v1501, 0
  %1505 = vmatprep.subr.bf16.mxu0 0
  %1506 = vmatpush1.bf16.msra.mxu0 %v331
  %1507 = vmatprep.subr.bf16.mxu0 0
  %1508 = vmatpush1.bf16.msra.mxu0 %v332
  %1509 = vmatprep.subr.bf16.mxu0 0
  %1510 = vmatpush1.bf16.msra.mxu0 0
  %1511 = vmatprep.subr.bf16.mxu0 0
  %1512 = vmatpush1.bf16.msra.mxu0 0
  %1513 = vmatprep.subr.bf16.mxu0 0
  %1514 = vmatpush1.bf16.msra.mxu0 0
  %1515 = vmatprep.subr.bf16.mxu0 0
  %1516 = vmatpush1.bf16.msra.mxu0 0
  %1517 = vmatprep.subr.bf16.mxu0 0
  %1518 = vmatpush1.bf16.msra.mxu0 0
  %1519 = vmatprep.subr.bf16.mxu0 0
  %1520 = vmatpush1.bf16.msra.mxu0 0
  %1521 = vmatprep.subr.bf16.mxu0 0
  %1522 = vmatpush1.bf16.msra.mxu0 0
  %1523 = vmatprep.subr.bf16.mxu0 0
  %1524 = vmatpush1.bf16.msra.mxu0 0
  %1525 = vmatprep.subr.bf16.mxu0 0
  %1526 = vmatpush1.bf16.msra.mxu0 0
  %1527 = vmatprep.subr.bf16.mxu0 0
  %1528 = vmatpush1.bf16.msra.mxu0 0
  %1529 = vmatprep.subr.bf16.mxu0 0
  %1530 = vmatpush1.bf16.msra.mxu0 0
  %1531 = vmatprep.subr.bf16.mxu0 0
  %1532 = vmatpush1.bf16.msra.mxu0 0
  %1533 = vmatprep.subr.bf16.mxu0 0
  %1534 = vmatpush1.bf16.msra.mxu0 0
  %1535 = vmatprep.subr.bf16.mxu0 0
  %1536 = vmatpush1.bf16.msra.mxu0 0
  %1537 = vmatprep.mubr.bf16.mxu0 0
  %1538 = vmatmul.mubr.bf16.gmra.mrb[0].mxu0 %v1503
  %v1539 = vpop.f32.mrb[0].mxu0
  %v1540 = vadd.f32 0.0, %v1539
  %v1541 = vpop.f32.mrb[0].mxu0
  %v1542 = vpop.f32.mrb[0].mxu0
  %v1543 = vpop.f32.mrb[0].mxu0
  %1544 = vdwg.mxu0
  %v1545 = vadd.f32 %v1425, %v1540
  %v1546 = vxor.u32 %v1545, 2147483648
  %v1547 = vmul.f32 %v1546, 1.442695
  %v1548 = vpow.pop %v1547
  %v1549 = vadd.f32 %v1548, 1.0
  %v1550 = vrcp.pop %v1549
  %v1551 = vmul.f32 1.0, %v1550
  %v1552 = vmul.f32 %v1551, 2.0
  %v1553 = vsub.f32 %v1552, 1.0
  %v1554 = vmul.f32 %v1551, %v1370
  %1556 = vrot.lane.b32.xlu0 %v1553, 64
  %v1557 = vpop.permute.xlu0 %1556
  %v1559 = vmul.f32 %v1551, %v1557
  %1561 = vrot.lane.b32.xlu0 %v1559, 32
  %v1562 = vpop.permute.xlu0 %1561
  %v1564 = vadd.f32 %v1554, %v1562
  %v1565 = vtanh.pop %v1564
  %1567 = vrot.lane.b32.xlu0 %v1565, 64
  %v1568 = vpop.permute.xlu0 %1567
  %v1570 = vmul.f32 %v1551, %v1568
  %1572 = vrot.lane.b32.xlu0 %v1570, 32
  %v1573 = vpop.permute.xlu0 %1572
  %s1575 = scalar_lea.vmem [#allocation3], 48
  %1576 = vst.msk [vmem:[%s1575] sm:$0xff] %vm188, %v1573
  %v1577 = vpack.c.bf16 %v1570, %v1570
  %1579 = vrot.lane.b32.xlu0 %v1577, 32
  %v1580 = vpop.permute.xlu0 %1579
  %v1582 = vsel %vm188, %v1580, 0
  %1584 = vmatprep.subr.bf16.mxu0 0
  %1585 = vmatpush1.bf16.msra.mxu0 %v184
  %1586 = vmatprep.subr.bf16.mxu0 0
  %1587 = vmatpush1.bf16.msra.mxu0 %v185
  %1588 = vmatprep.subr.bf16.mxu0 0
  %1589 = vmatpush1.bf16.msra.mxu0 0
  %1590 = vmatprep.subr.bf16.mxu0 0
  %1591 = vmatpush1.bf16.msra.mxu0 0
  %1592 = vmatprep.subr.bf16.mxu0 0
  %1593 = vmatpush1.bf16.msra.mxu0 0
  %1594 = vmatprep.subr.bf16.mxu0 0
  %1595 = vmatpush1.bf16.msra.mxu0 0
  %1596 = vmatprep.subr.bf16.mxu0 0
  %1597 = vmatpush1.bf16.msra.mxu0 0
  %1598 = vmatprep.subr.bf16.mxu0 0
  %1599 = vmatpush1.bf16.msra.mxu0 0
  %1600 = vmatprep.subr.bf16.mxu0 0
  %1601 = vmatpush1.bf16.msra.mxu0 0
  %1602 = vmatprep.subr.bf16.mxu0 0
  %1603 = vmatpush1.bf16.msra.mxu0 0
  %1604 = vmatprep.subr.bf16.mxu0 0
  %1605 = vmatpush1.bf16.msra.mxu0 0
  %1606 = vmatprep.subr.bf16.mxu0 0
  %1607 = vmatpush1.bf16.msra.mxu0 0
  %1608 = vmatprep.subr.bf16.mxu0 0
  %1609 = vmatpush1.bf16.msra.mxu0 0
  %1610 = vmatprep.subr.bf16.mxu0 0
  %1611 = vmatpush1.bf16.msra.mxu0 0
  %1612 = vmatprep.subr.bf16.mxu0 0
  %1613 = vmatpush1.bf16.msra.mxu0 0
  %1614 = vmatprep.subr.bf16.mxu0 0
  %1615 = vmatpush1.bf16.msra.mxu0 0
  %1616 = vmatprep.mubr.bf16.mxu0 0
  %1617 = vmatmul.mubr.bf16.gmra.mrb[0].mxu0 %v1582
  %v1618 = vpop.f32.mrb[0].mxu0
  %v1619 = vadd.f32 %v163, %v1618
  %v1620 = vpop.f32.mrb[0].mxu0
  %v1621 = vpop.f32.mrb[0].mxu0
  %v1622 = vpop.f32.mrb[0].mxu0
  %1623 = vdwg.mxu0
  %s1624 = scalar_lea.vmem [#allocation2], 56
  %v1625 = vld [vmem:[%s1624] sm:$0xff]
  %1626 = vmatprep.subr.bf16.mxu0 0
  %1627 = vmatpush1.bf16.msra.mxu0 %v242
  %1628 = vmatprep.subr.bf16.mxu0 0
  %1629 = vmatpush1.bf16.msra.mxu0 %v243
  %1630 = vmatprep.subr.bf16.mxu0 0
  %1631 = vmatpush1.bf16.msra.mxu0 0
  %1632 = vmatprep.subr.bf16.mxu0 0
  %1633 = vmatpush1.bf16.msra.mxu0 0
  %1634 = vmatprep.subr.bf16.mxu0 0
  %1635 = vmatpush1.bf16.msra.mxu0 0
  %1636 = vmatprep.subr.bf16.mxu0 0
  %1637 = vmatpush1.bf16.msra.mxu0 0
  %1638 = vmatprep.subr.bf16.mxu0 0
  %1639 = vmatpush1.bf16.msra.mxu0 0
  %1640 = vmatprep.subr.bf16.mxu0 0
  %1641 = vmatpush1.bf16.msra.mxu0 0
  %1642 = vmatprep.subr.bf16.mxu0 0
  %1643 = vmatpush1.bf16.msra.mxu0 0
  %1644 = vmatprep.subr.bf16.mxu0 0
  %1645 = vmatpush1.bf16.msra.mxu0 0
  %1646 = vmatprep.subr.bf16.mxu0 0
  %1647 = vmatpush1.bf16.msra.mxu0 0
  %1648 = vmatprep.subr.bf16.mxu0 0
  %1649 = vmatpush1.bf16.msra.mxu0 0
  %1650 = vmatprep.subr.bf16.mxu0 0
  %1651 = vmatpush1.bf16.msra.mxu0 0
  %1652 = vmatprep.subr.bf16.mxu0 0
  %1653 = vmatpush1.bf16.msra.mxu0 0
  %1654 = vmatprep.subr.bf16.mxu0 0
  %1655 = vmatpush1.bf16.msra.mxu0 0
  %1656 = vmatprep.subr.bf16.mxu0 0
  %1657 = vmatpush1.bf16.msra.mxu0 0
  %1658 = vmatprep.mubr.bf16.mxu0 0
  %1659 = vmatmul.mubr.bf16.gmra.mrb[0].mxu0 %v1503
  %v1660 = vpop.f32.mrb[0].mxu0
  %v1661 = vadd.f32 0.0, %v1660
  %v1662 = vpop.f32.mrb[0].mxu0
  %v1663 = vpop.f32.mrb[0].mxu0
  %v1664 = vpop.f32.mrb[0].mxu0
  %1665 = vdwg.mxu0
  %v1666 = vadd.f32 %v1625, %v1661
  %v1667 = vxor.u32 %v1666, 2147483648
  %v1668 = vmul.f32 %v1667, 1.442695
  %v1669 = vpow.pop %v1668
  %v1670 = vadd.f32 %v1669, 1.0
  %v1671 = vrcp.pop %v1670
  %v1672 = vmul.f32 1.0, %v1671
  %v1673 = vmul.f32 %v1672, 2.0
  %v1674 = vsub.f32 %v1673, 1.0
  %v1675 = vmul.f32 %v1672, %v1491
  %1677 = vrot.lane.b32.xlu0 %v1674, 64
  %v1678 = vpop.permute.xlu0 %1677
  %v1680 = vmul.f32 %v1672, %v1678
  %1682 = vrot.lane.b32.xlu0 %v1680, 32
  %v1683 = vpop.permute.xlu0 %1682
  %v1685 = vadd.f32 %v1675, %v1683
  %v1686 = vtanh.pop %v1685
  %1688 = vrot.lane.b32.xlu0 %v1686, 64
  %v1689 = vpop.permute.xlu0 %1688
  %v1691 = vmul.f32 %v1672, %v1689
  %v1692 = vpack.c.bf16 %v1691, %v1691
  %1694 = vrot.lane.b32.xlu0 %v1692, 32
  %v1695 = vpop.permute.xlu0 %1694
  %v1697 = vsel %vm188, %v1695, 0
  %1699 = vmatprep.subr.bf16.mxu0 0
  %1700 = vmatpush1.bf16.msra.mxu0 %v331
  %1701 = vmatprep.subr.bf16.mxu0 0
  %1702 = vmatpush1.bf16.msra.mxu0 %v332
  %1703 = vmatprep.subr.bf16.mxu0 0
  %1704 = vmatpush1.bf16.msra.mxu0 0
  %1705 = vmatprep.subr.bf16.mxu0 0
  %1706 = vmatpush1.bf16.msra.mxu0 0
  %1707 = vmatprep.subr.bf16.mxu0 0
  %1708 = vmatpush1.bf16.msra.mxu0 0
  %1709 = vmatprep.subr.bf16.mxu0 0
  %1710 = vmatpush1.bf16.msra.mxu0 0
  %1711 = vmatprep.subr.bf16.mxu0 0
  %1712 = vmatpush1.bf16.msra.mxu0 0
  %1713 = vmatprep.subr.bf16.mxu0 0
  %1714 = vmatpush1.bf16.msra.mxu0 0
  %1715 = vmatprep.subr.bf16.mxu0 0
  %1716 = vmatpush1.bf16.msra.mxu0 0
  %1717 = vmatprep.subr.bf16.mxu0 0
  %1718 = vmatpush1.bf16.msra.mxu0 0
  %1719 = vmatprep.subr.bf16.mxu0 0
  %1720 = vmatpush1.bf16.msra.mxu0 0
  %1721 = vmatprep.subr.bf16.mxu0 0
  %1722 = vmatpush1.bf16.msra.mxu0 0
  %1723 = vmatprep.subr.bf16.mxu0 0
  %1724 = vmatpush1.bf16.msra.mxu0 0
  %1725 = vmatprep.subr.bf16.mxu0 0
  %1726 = vmatpush1.bf16.msra.mxu0 0
  %1727 = vmatprep.subr.bf16.mxu0 0
  %1728 = vmatpush1.bf16.msra.mxu0 0
  %1729 = vmatprep.subr.bf16.mxu0 0
  %1730 = vmatpush1.bf16.msra.mxu0 0
  %1731 = vmatprep.mubr.bf16.mxu0 0
  %1732 = vmatmul.mubr.bf16.gmra.mrb[0].mxu0 %v1697
  %v1733 = vpop.f32.mrb[0].mxu0
  %v1734 = vadd.f32 0.0, %v1733
  %v1735 = vpop.f32.mrb[0].mxu0
  %v1736 = vpop.f32.mrb[0].mxu0
  %v1737 = vpop.f32.mrb[0].mxu0
  %1738 = vdwg.mxu0
  %v1739 = vadd.f32 %v1619, %v1734
  %v1740 = vxor.u32 %v1739, 2147483648
  %v1741 = vmul.f32 %v1740, 1.442695
  %v1742 = vpow.pop %v1741
  %v1743 = vadd.f32 %v1742, 1.0
  %v1744 = vrcp.pop %v1743
  %v1745 = vmul.f32 1.0, %v1744
  %v1746 = vmul.f32 %v1745, 2.0
  %v1747 = vsub.f32 %v1746, 1.0
  %v1748 = vmul.f32 %v1745, %v1564
  %1750 = vrot.lane.b32.xlu0 %v1747, 64
  %v1751 = vpop.permute.xlu0 %1750
  %v1753 = vmul.f32 %v1745, %v1751
  %1755 = vrot.lane.b32.xlu0 %v1753, 32
  %v1756 = vpop.permute.xlu0 %1755
  %v1758 = vadd.f32 %v1748, %v1756
  %v1759 = vtanh.pop %v1758
  %1761 = vrot.lane.b32.xlu0 %v1759, 64
  %v1762 = vpop.permute.xlu0 %1761
  %v1764 = vmul.f32 %v1745, %v1762
  %1766 = vrot.lane.b32.xlu0 %v1764, 32
  %v1767 = vpop.permute.xlu0 %1766
  %s1769 = scalar_lea.vmem [#allocation3], 56
  %1770 = vst.msk [vmem:[%s1769] sm:$0xff] %vm188, %v1767
  %v1771 = vld [vmem:[#allocation3] sm:$0xff]
  %v1772 = vld [vmem:[#allocation3 + $0x8] sm:$0xff]
  %v1773 = vld [vmem:[#allocation3 + $0x10] sm:$0xff]
  %v1774 = vld [vmem:[#allocation3 + $0x18] sm:$0xff]
  %v1775 = vld [vmem:[#allocation3 + $0x20] sm:$0xff]
  %v1776 = vld [vmem:[#allocation3 + $0x28] sm:$0xff]
  %v1777 = vld [vmem:[#allocation3 + $0x30] sm:$0xff]
  %v1778 = vld [vmem:[#allocation3 + $0x38] sm:$0xff]
  %v1780 = vsel %vm188, %v1771, 0
  %v1783 = vsel %vm188, %v1772, 0
  %v1786 = vsel %vm188, %v1773, 0
  %v1789 = vsel %vm188, %v1774, 0
  %v1792 = vsel %vm188, %v1775, 0
  %v1795 = vsel %vm188, %v1776, 0
  %v1798 = vsel %vm188, %v1777, 0
  %v1801 = vsel %vm188, %v1778, 0
  %1803 = vmatprep.subr.mxu0 0.0
  %1804 = vmatpush1.msra.mxu0 %v165
  %1805 = vmatprep.subr.mxu0 0.0
  %1806 = vmatpush1.msra.mxu0 %v166
  %1807 = vmatprep.subr.mxu0 0.0
  %1808 = vmatpush1.msra.mxu0 %v167
  %1809 = vmatprep.subr.mxu0 0.0
  %1810 = vmatpush1.msra.mxu0 %v168
  %1811 = vmatprep.subr.mxu0 0.0
  %1812 = vmatpush1.msra.mxu0 0.0
  %1813 = vmatprep.subr.mxu0 0.0
  %1814 = vmatpush1.msra.mxu0 0.0
  %1815 = vmatprep.subr.mxu0 0.0
  %1816 = vmatpush1.msra.mxu0 0.0
  %1817 = vmatprep.subr.mxu0 0.0
  %1818 = vmatpush1.msra.mxu0 0.0
  %1819 = vmatprep.subr.mxu0 0.0
  %1820 = vmatpush1.msra.mxu0 0.0
  %1821 = vmatprep.subr.mxu0 0.0
  %1822 = vmatpush1.msra.mxu0 0.0
  %1823 = vmatprep.subr.mxu0 0.0
  %1824 = vmatpush1.msra.mxu0 0.0
  %1825 = vmatprep.subr.mxu0 0.0
  %1826 = vmatpush1.msra.mxu0 0.0
  %1827 = vmatprep.subr.mxu0 0.0
  %1828 = vmatpush1.msra.mxu0 0.0
  %1829 = vmatprep.subr.mxu0 0.0
  %1830 = vmatpush1.msra.mxu0 0.0
  %1831 = vmatprep.subr.mxu0 0.0
  %1832 = vmatpush1.msra.mxu0 0.0
  %1833 = vmatprep.subr.mxu0 0.0
  %1834 = vmatpush1.msra.mxu0 0.0
  %1835 = vmatprep.subr.mxu0 0.0
  %1836 = vmatpush1.msra.mxu0 0.0
  %1837 = vmatprep.subr.mxu0 0.0
  %1838 = vmatpush1.msra.mxu0 0.0
  %1839 = vmatprep.subr.mxu0 0.0
  %1840 = vmatpush1.msra.mxu0 0.0
  %1841 = vmatprep.subr.mxu0 0.0
  %1842 = vmatpush1.msra.mxu0 0.0
  %1843 = vmatprep.subr.mxu0 0.0
  %1844 = vmatpush1.msra.mxu0 0.0
  %1845 = vmatprep.subr.mxu0 0.0
  %1846 = vmatpush1.msra.mxu0 0.0
  %1847 = vmatprep.subr.mxu0 0.0
  %1848 = vmatpush1.msra.mxu0 0.0
  %1849 = vmatprep.subr.mxu0 0.0
  %1850 = vmatpush1.msra.mxu0 0.0
  %1851 = vmatprep.subr.mxu0 0.0
  %1852 = vmatpush1.msra.mxu0 0.0
  %1853 = vmatprep.subr.mxu0 0.0
  %1854 = vmatpush1.msra.mxu0 0.0
  %1855 = vmatprep.subr.mxu0 0.0
  %1856 = vmatpush1.msra.mxu0 0.0
  %1857 = vmatprep.subr.mxu0 0.0
  %1858 = vmatpush1.msra.mxu0 0.0
  %1859 = vmatprep.subr.mxu0 0.0
  %1860 = vmatpush1.msra.mxu0 0.0
  %1861 = vmatprep.subr.mxu0 0.0
  %1862 = vmatpush1.msra.mxu0 0.0
  %1863 = vmatprep.subr.mxu0 0.0
  %1864 = vmatpush1.msra.mxu0 0.0
  %1865 = vmatprep.subr.mxu0 0.0
  %1866 = vmatpush1.msra.mxu0 0.0
  %1867 = vmatprep.mubr.f32.mxu0 0.0
  %1868 = vmatmul.mubr.f32.gmra.mrb[0].mxu0 %v1780
  %v1869 = vpop.f32.mrb[0].mxu0
  %v1870 = vadd.f32 0.0, %v1869
  %v1871 = vpop.f32.mrb[0].mxu0
  %1872 = vmatprep.mubr.f32.mxu0 0.0
  %1873 = vmatmul.mubr.f32.gmra.mrb[0].mxu0 %v1783
  %v1874 = vpop.f32.mrb[0].mxu0
  %v1875 = vadd.f32 0.0, %v1874
  %v1876 = vpop.f32.mrb[0].mxu0
  %1877 = vmatprep.mubr.f32.mxu0 0.0
  %1878 = vmatmul.mubr.f32.gmra.mrb[0].mxu0 %v1786
  %v1879 = vpop.f32.mrb[0].mxu0
  %v1880 = vadd.f32 0.0, %v1879
  %v1881 = vpop.f32.mrb[0].mxu0
  %1882 = vmatprep.mubr.f32.mxu0 0.0
  %1883 = vmatmul.mubr.f32.gmra.mrb[0].mxu0 %v1789
  %v1884 = vpop.f32.mrb[0].mxu0
  %v1885 = vadd.f32 0.0, %v1884
  %v1886 = vpop.f32.mrb[0].mxu0
  %1887 = vmatprep.mubr.f32.mxu0 0.0
  %1888 = vmatmul.mubr.f32.gmra.mrb[0].mxu0 %v1792
  %v1889 = vpop.f32.mrb[0].mxu0
  %v1890 = vadd.f32 0.0, %v1889
  %v1891 = vpop.f32.mrb[0].mxu0
  %1892 = vmatprep.mubr.f32.mxu0 0.0
  %1893 = vmatmul.mubr.f32.gmra.mrb[0].mxu0 %v1795
  %v1894 = vpop.f32.mrb[0].mxu0
  %v1895 = vadd.f32 0.0, %v1894
  %v1896 = vpop.f32.mrb[0].mxu0
  %1897 = vmatprep.mubr.f32.mxu0 0.0
  %1898 = vmatmul.mubr.f32.gmra.mrb[0].mxu0 %v1798
  %v1899 = vpop.f32.mrb[0].mxu0
  %v1900 = vadd.f32 0.0, %v1899
  %v1901 = vpop.f32.mrb[0].mxu0
  %1902 = vmatprep.mubr.f32.mxu0 0.0
  %1903 = vmatmul.mubr.f32.gmra.mrb[0].mxu0 %v1801
  %v1904 = vpop.f32.mrb[0].mxu0
  %v1905 = vadd.f32 0.0, %v1904
  %v1906 = vpop.f32.mrb[0].mxu0
  %1907 = vdwg.mxu0
  %v1908 = vxor.u32 %v1870, 2147483648
  %v1909 = vxor.u32 %v1875, 2147483648
  %v1910 = vxor.u32 %v1880, 2147483648
  %v1911 = vxor.u32 %v1885, 2147483648
  %v1912 = vxor.u32 %v1890, 2147483648
  %v1913 = vxor.u32 %v1895, 2147483648
  %v1914 = vxor.u32 %v1900, 2147483648
  %v1915 = vxor.u32 %v1905, 2147483648
  %v1916 = vmul.f32 %v1908, 1.442695
  %v1917 = vpow.pop %v1916
  %v1918 = vmul.f32 %v1909, 1.442695
  %v1919 = vpow.pop %v1918
  %v1920 = vmul.f32 %v1910, 1.442695
  %v1921 = vpow.pop %v1920
  %v1922 = vmul.f32 %v1911, 1.442695
  %v1923 = vpow.pop %v1922
  %v1924 = vmul.f32 %v1912, 1.442695
  %v1925 = vpow.pop %v1924
  %v1926 = vmul.f32 %v1913, 1.442695
  %v1927 = vpow.pop %v1926
  %v1928 = vmul.f32 %v1914, 1.442695
  %v1929 = vpow.pop %v1928
  %v1930 = vmul.f32 %v1915, 1.442695
  %v1931 = vpow.pop %v1930
  %v1932 = vadd.f32 %v1917, 1.0
  %v1933 = vadd.f32 %v1919, 1.0
  %v1934 = vadd.f32 %v1921, 1.0
  %v1935 = vadd.f32 %v1923, 1.0
  %v1936 = vadd.f32 %v1925, 1.0
  %v1937 = vadd.f32 %v1927, 1.0
  %v1938 = vadd.f32 %v1929, 1.0
  %v1939 = vadd.f32 %v1931, 1.0
  %v1940 = vrcp.pop %v1932
  %v1941 = vmul.f32 1.0, %v1940
  %v1942 = vrcp.pop %v1933
  %v1943 = vmul.f32 1.0, %v1942
  %v1944 = vrcp.pop %v1934
  %v1945 = vmul.f32 1.0, %v1944
  %v1946 = vrcp.pop %v1935
  %v1947 = vmul.f32 1.0, %v1946
  %v1948 = vrcp.pop %v1936
  %v1949 = vmul.f32 1.0, %v1948
  %v1950 = vrcp.pop %v1937
  %v1951 = vmul.f32 1.0, %v1950
  %v1952 = vrcp.pop %v1938
  %v1953 = vmul.f32 1.0, %v1952
  %v1954 = vrcp.pop %v1939
  %v1955 = vmul.f32 1.0, %v1954
  %vm1956 = vcmask 7168
  %1957 = vst.msk [vmem:[%s10] sm:$0xff] %vm1956, %v1941
  %1958 = vst.msk [vmem:[%s10 + $0x8] sm:$0xff] %vm1956, %v1943
  %1959 = vst.msk [vmem:[%s10 + $0x10] sm:$0xff] %vm1956, %v1945
  %1960 = vst.msk [vmem:[%s10 + $0x18] sm:$0xff] %vm1956, %v1947
  %1961 = vst.msk [vmem:[%s10 + $0x20] sm:$0xff] %vm1956, %v1949
  %1962 = vst.msk [vmem:[%s10 + $0x28] sm:$0xff] %vm1956, %v1951
  %1963 = vst.msk [vmem:[%s10 + $0x30] sm:$0xff] %vm1956, %v1953
  %1964 = vst.msk [vmem:[%s10 + $0x38] sm:$0xff] %vm1956, %v1955
  // Predicated region
  $region42: #{tpu_custom_call.1} parent=0 // pred_check
    _
  $region43: #{tpu_custom_call.1} parent=0 // pred_check_branch
    %1966 = sbr.rel (0) target = $region45
  $region44: #{tpu_custom_call.1} parent=0 // pred_region
    _
  $region45: #{tpu_custom_call.1} parent=0 // pred_fallthru
    _
  // Predicated region
  $region46: #{tpu_custom_call.1} parent=0 // pred_check
    _
  $region47: #{tpu_custom_call.1} parent=0 // pred_check_branch
    %1968 = sbr.rel (0) target = $region49
  $region48: #{tpu_custom_call.1} parent=0 // pred_region
    _
  $region49: #{tpu_custom_call.1} parent=0 // pred_fallthru
    _

</llo_original>
